<compile_context>
chip_gen: v5e
topology: v5e:2x2
jax: 0.10.0
libtpu: 0.0.40
codegen_flags: <defaults>
</compile_context>

<pallas_src>
import functools

import jax
import jax.numpy as jnp
from jax import lax
from jax.experimental import pallas as pl
from jax.experimental.pallas import tpu as pltpu

EPS = 1e-5


def _fused_kernel(w_ref, x_ref, gamma_ref, beta_ref, res_ref, o_ref,
                  *, inv_count: float):
    # w_ref:      (bc,  Cin)  1x1 conv weight block (PyTorch OI layout, bf16)
    # x_ref:      (Cin, M)    conv input (full, replicated across Cout blocks)
    # gamma/beta: (bc, 1)     BN affine params for this Cout block
    # res_ref:    (bc, M)     residual (x293) block
    # o_ref:      (bc, M)
    #
    # Weight is upcast in-register; DEFAULT precision truncates both operands
    # to bf16 at the MXU, so this matches a bf16-weight single-pass matmul
    # while keeping the f32 accumulator.
    w = w_ref[...].astype(jnp.float32)
    y = jnp.dot(w, x_ref[...],
                preferred_element_type=jnp.float32,
                precision=lax.Precision.DEFAULT)

    # Training-mode BN batch statistics, per channel (= per row here).
    # The lane tail (M not a multiple of 128) is masked by Mosaic, so the
    # sums only see the M valid columns.
    sum_y = jnp.sum(y, axis=1, keepdims=True)           # (bc, 1)
    sum_y2 = jnp.sum(y * y, axis=1, keepdims=True)       # (bc, 1)
    mean = sum_y * inv_count
    var = sum_y2 * inv_count - mean * mean                # biased variance
    inv_std = lax.rsqrt(var + EPS)

    # Fold BN into per-channel scale/shift so the (bc, M)-sized work is
    # just one mul + two adds.  (Epilogue is fully hidden under input DMA;
    # intentionally not micro-optimized.)
    scale = gamma_ref[...] * inv_std                      # (bc, 1)
    shift = beta_ref[...] - mean * scale                  # (bc, 1)

    o_ref[...] = (y * scale + shift + res_ref[...]).astype(o_ref.dtype)


def conv_bn_add(x305, conv_w, gamma, beta, x293, *, cout_blocks: int = 2):
    """x305: (N, 1152, H, W) NCHW; conv_w: (192, 1152, 1, 1) (bf16 preferred);
    gamma/beta: (192,); x293: (N, 192, H, W) NCHW.  Returns NCHW f32."""
    n, cin, h, w = x305.shape
    cout = conv_w.shape[0]
    m = n * h * w

    # NCHW-native (C, M) matrices.  For N == 1 these transposes are degenerate
    # (size-1 axis) and fold into pure reshapes — no real data movement.
    x_mat = jnp.transpose(x305, (1, 0, 2, 3)).reshape(cin, m)
    res_mat = jnp.transpose(x293, (1, 0, 2, 3)).reshape(cout, m)
    w_mat = conv_w[:, :, 0, 0]                            # (Cout, Cin), keeps dtype

    gamma2 = gamma.reshape(cout, 1).astype(jnp.float32)
    beta2 = beta.reshape(cout, 1).astype(jnp.float32)

    assert cout % cout_blocks == 0
    bc = cout // cout_blocks
    assert bc % 8 == 0, "Cout block must be sublane-aligned (multiple of 8)"
    # Whole-problem-in-VMEM assumption: x + double-buffering must stay tiny.
    # If M grows (larger N/H/W), switch to an M-tiled grid with partial sums.
    assert cin * m * 4 <= 8 * 1024 * 1024, "M grew; use the M-tiled variant"

    kernel = functools.partial(_fused_kernel, inv_count=1.0 / m)

    w_bytes = cout * cin * jnp.dtype(w_mat.dtype).itemsize
    cost = pl.CostEstimate(
        flops=2 * cout * cin * m,
        transcendentals=cout,                              # rsqrt per channel
        bytes_accessed=(w_bytes + cin * m * 4              # weight + x
                        + cout * m * 4 * 2                 # residual + output
                        + cout * 4 * 2),                   # gamma + beta
    )

    out_mat = pl.pallas_call(
        kernel,
        out_shape=jax.ShapeDtypeStruct((cout, m), jnp.float32),
        grid=(cout_blocks,),
        in_specs=[
            pl.BlockSpec((bc, cin), lambda i: (i, 0)),     # weight block
            pl.BlockSpec((cin, m), lambda i: (0, 0)),      # x (replicated)
            pl.BlockSpec((bc, 1), lambda i: (i, 0)),       # gamma block
            pl.BlockSpec((bc, 1), lambda i: (i, 0)),       # beta block
            pl.BlockSpec((bc, m), lambda i: (i, 0)),       # residual block
        ],
        out_specs=pl.BlockSpec((bc, m), lambda i: (i, 0)),
        compiler_params=pltpu.CompilerParams(
            dimension_semantics=("parallel",)),            # 2 TCs on v7x
        cost_estimate=cost,
    )(w_mat, x_mat, gamma2, beta2, res_mat)

    # Back to NCHW (degenerate for N=1); no slicing needed (output is unpadded).
    out = out_mat.reshape(cout, n, h, w)
    return jnp.transpose(out, (1, 0, 2, 3))


def reference(x305, conv_w, gamma, beta, x293):
    # Pure-JAX reference (training-mode BN with batch stats, biased variance).
    y = lax.conv_general_dilated(
        x305, conv_w, window_strides=(1, 1), padding="VALID",
        dimension_numbers=("NCHW", "OIHW", "NCHW"))
    mean = jnp.mean(y, axis=(0, 2, 3), keepdims=True)
    var = jnp.mean((y - mean) ** 2, axis=(0, 2, 3), keepdims=True)
    yn = (y - mean) * lax.rsqrt(var + EPS)
    yn = yn * gamma.reshape(1, -1, 1, 1) + beta.reshape(1, -1, 1, 1)
    return yn + x293


if __name__ == "__main__":
    key = jax.random.PRNGKey(0)
    k1, k2, k3, k4, k5 = jax.random.split(key, 5)

    N, CIN, COUT, H, W = 1, 1152, 192, 7, 7

    x305 = jax.random.normal(k1, (N, CIN, H, W), dtype=jnp.float32)
    x293 = jax.random.normal(k2, (N, COUT, H, W), dtype=jnp.float32)
    conv_w_f32 = jax.random.normal(k3, (COUT, CIN, 1, 1), dtype=jnp.float32) * 0.02
    gamma = 1.0 + 0.1 * jax.random.normal(k4, (COUT,), dtype=jnp.float32)
    beta = 0.1 * jax.random.normal(k5, (COUT,), dtype=jnp.float32)

    # Parameter-init-time cast: carry the conv weight in bf16 (dominant HBM
    # stream, halved), never cast per call in the wrapper.
    conv_w = conv_w_f32.astype(jnp.bfloat16)

    out = conv_bn_add(x305, conv_w, gamma, beta, x293)
    jax.block_until_ready(out)

    # Reference uses the same bf16-quantized parameters (upcast for lax.conv)
    # so the check isolates kernel correctness from the weight-precision choice.
    ref = reference(x305, conv_w.astype(jnp.float32), gamma, beta, x293)
    assert out.shape == (N, COUT, H, W)
    assert jnp.allclose(out, ref, atol=2e-4, rtol=2e-4)

    print("KERNEL_OK")
</pallas_src>

<mosaic_0001>
module attributes {stable_mosaic.version = 11 : i64} {
  func.func @_fused_kernel(%arg0: i32, %arg1: memref<96x1152xbf16, #tpu.memory_space<vmem>>, %arg2: memref<1152x49xf32, #tpu.memory_space<vmem>>, %arg3: memref<96x1xf32, #tpu.memory_space<vmem>>, %arg4: memref<96x1xf32, #tpu.memory_space<vmem>>, %arg5: memref<96x49xf32, #tpu.memory_space<vmem>>, %arg6: memref<96x49xf32, #tpu.memory_space<vmem>>) attributes {dimension_semantics = [#tpu.dimension_semantics<parallel>], iteration_bounds = array<i64: 2>, scalar_prefetch = 0 : i64, scratch_operands = 0 : i64, tpu.core_type = #tpu.core_type<tc>, window_params = [{transform_indices = @transform_0, window_bounds = array<i64: 96, 1152>}, {pipeline_mode = #tpu.pipeline_mode<synchronous>, transform_indices = @transform_1, window_bounds = array<i64: 1152, 49>}, {transform_indices = @transform_2, window_bounds = array<i64: 96, 1>}, {transform_indices = @transform_3, window_bounds = array<i64: 96, 1>}, {transform_indices = @transform_4, window_bounds = array<i64: 96, 49>}, {transform_indices = @transform_5, window_bounds = array<i64: 96, 49>}]} {
    %c0 = arith.constant 0 : index
    %c0_0 = arith.constant 0 : index
    %0 = vector.load %arg1[%c0, %c0_0] : memref<96x1152xbf16, #tpu.memory_space<vmem>>, vector<96x1152xbf16>
    %1 = arith.extf %0 : vector<96x1152xbf16> to vector<96x1152xf32>
    %c0_1 = arith.constant 0 : index
    %c0_2 = arith.constant 0 : index
    %2 = vector.load %arg2[%c0_1, %c0_2] : memref<1152x49xf32, #tpu.memory_space<vmem>>, vector<1152x49xf32>
    %cst = arith.constant dense<0.000000e+00> : vector<96x49xf32>
    %3 = tpu.matmul %1, %2, %cst {dimension_numbers = #tpu.dot_dimension_numbers<[1], [0], [0], [1], [0, 0, 1, 1], [], []>} : vector<96x1152xf32>, vector<1152x49xf32>, vector<96x49xf32> -> vector<96x49xf32>
    %cst_3 = arith.constant dense<0.000000e+00> : vector<96xf32>
    %4 = vector.multi_reduction <add>, %3, %cst_3 [1] : vector<96x49xf32> to vector<96xf32>
    %5 = vector.shape_cast %4 : vector<96xf32> to vector<96x1xf32>
    %6 = arith.mulf %3, %3 : vector<96x49xf32>
    %cst_4 = arith.constant dense<0.000000e+00> : vector<96xf32>
    %7 = vector.multi_reduction <add>, %6, %cst_4 [1] : vector<96x49xf32> to vector<96xf32>
    %8 = vector.shape_cast %7 : vector<96xf32> to vector<96x1xf32>
    %cst_5 = arith.constant 0.0204081628 : f32
    %9 = vector.broadcast %cst_5 : f32 to vector<96x1xf32>
    %10 = arith.mulf %5, %9 : vector<96x1xf32>
    %cst_6 = arith.constant 0.0204081628 : f32
    %11 = vector.broadcast %cst_6 : f32 to vector<96x1xf32>
    %12 = arith.mulf %8, %11 : vector<96x1xf32>
    %13 = arith.mulf %10, %10 : vector<96x1xf32>
    %14 = arith.subf %12, %13 : vector<96x1xf32>
    %cst_7 = arith.constant 9.99999974E-6 : f32
    %15 = vector.broadcast %cst_7 : f32 to vector<96x1xf32>
    %16 = arith.addf %14, %15 : vector<96x1xf32>
    %17 = math.rsqrt %16 : vector<96x1xf32>
    %c0_8 = arith.constant 0 : index
    %c0_9 = arith.constant 0 : index
    %18 = vector.load %arg3[%c0_8, %c0_9] : memref<96x1xf32, #tpu.memory_space<vmem>>, vector<96x1xf32>
    %19 = arith.mulf %18, %17 : vector<96x1xf32>
    %c0_10 = arith.constant 0 : index
    %c0_11 = arith.constant 0 : index
    %20 = vector.load %arg4[%c0_10, %c0_11] : memref<96x1xf32, #tpu.memory_space<vmem>>, vector<96x1xf32>
    %21 = arith.mulf %10, %19 : vector<96x1xf32>
    %22 = arith.subf %20, %21 : vector<96x1xf32>
    %23 = vector.broadcast %19 : vector<96x1xf32> to vector<96x49xf32>
    %24 = arith.mulf %3, %23 : vector<96x49xf32>
    %25 = vector.broadcast %22 : vector<96x1xf32> to vector<96x49xf32>
    %26 = arith.addf %24, %25 : vector<96x49xf32>
    %c0_12 = arith.constant 0 : index
    %c0_13 = arith.constant 0 : index
    %27 = vector.load %arg5[%c0_12, %c0_13] : memref<96x49xf32, #tpu.memory_space<vmem>>, vector<96x49xf32>
    %28 = arith.addf %26, %27 : vector<96x49xf32>
    %c0_14 = arith.constant 0 : index
    %c0_15 = arith.constant 0 : index
    %29 = vector.load %arg6[%c0_14, %c0_15] : memref<96x49xf32, #tpu.memory_space<vmem>>, vector<96x49xf32>
    tpu.vector_store %arg6[%c0_14, %c0_15], %28 {strides = array<i32>} : memref<96x49xf32, #tpu.memory_space<vmem>>, vector<96x49xf32>,
    return
  }
  func.func @transform_0(%arg0: i32) -> (i32, i32) {
    %c0_i32 = arith.constant 0 : i32
    %c0_i32_0 = arith.constant 0 : i32
    return %arg0, %c0_i32 : i32, i32
  }
  func.func @transform_1(%arg0: i32) -> (i32, i32) {
    %c0_i32 = arith.constant 0 : i32
    %c0_i32_0 = arith.constant 0 : i32
    %c0_i32_1 = arith.constant 0 : i32
    return %c0_i32, %c0_i32_0 : i32, i32
  }
  func.func @transform_2(%arg0: i32) -> (i32, i32) {
    %c0_i32 = arith.constant 0 : i32
    %c0_i32_0 = arith.constant 0 : i32
    return %arg0, %c0_i32 : i32, i32
  }
  func.func @transform_3(%arg0: i32) -> (i32, i32) {
    %c0_i32 = arith.constant 0 : i32
    %c0_i32_0 = arith.constant 0 : i32
    return %arg0, %c0_i32 : i32, i32
  }
  func.func @transform_4(%arg0: i32) -> (i32, i32) {
    %c0_i32 = arith.constant 0 : i32
    %c0_i32_0 = arith.constant 0 : i32
    return %arg0, %c0_i32 : i32, i32
  }
  func.func @transform_5(%arg0: i32) -> (i32, i32) {
    %c0_i32 = arith.constant 0 : i32
    %c0_i32_0 = arith.constant 0 : i32
    return %arg0, %c0_i32 : i32, i32
  }
}

</mosaic_0001>

<llo_original>
// kernel: tpu_custom_call.1
$region0: #{tpu_custom_call.1}
  #allocation0 [shape = 'u32[]', space=smem, size = 0x4, offset = 0x4, fixed_abs, tag = 'smem constant byte address 0x4 - core index']
  #allocation1 [shape = 'u32[72,128]{1,0:T(1,128)}', space=vmem, size = 0x9000, scoped, tag = 'internal scratch']
  %s0 = inlined_call_operand.vmem [shape: bf16[192,1152], index: 0, kind: input, shape index: {}]
  %s1 = inlined_call_operand.vmem [shape: f32[1152,49], index: 1, kind: input, shape index: {}]
  %s2 = inlined_call_operand.vmem [shape: f32[192,1], index: 2, kind: input, shape index: {}]
  %s3 = inlined_call_operand.vmem [shape: f32[192,1], index: 3, kind: input, shape index: {}]
  %s4 = inlined_call_operand.vmem [shape: f32[192,49], index: 4, kind: input, shape index: {}]
  %s5 = inlined_call_operand.vmem [shape: f32[192,49], index: 5, kind: output, shape index: {}]
  %s6 = sld [smem:[#allocation0]]
  $region53: #{tpu_custom_call.1} parent=0
    _
  %s8 = ssub.s32 1, %s6
  %s9 = scalar_select 0, %s8, %s6
  loop: start=0, step=1, limit=4
  $region2: #{tpu_custom_call.1} parent=0 // loop_pre_header
    _
  $region3: #{tpu_custom_call.1} parent=0 // loop_header
    %s11 = sphi 0, %s15
    %p12 = scmp.ge.s32.totalorder %s11, 4
    %s21 = sphi 0, %s23
    %s24 = sphi 0, %s21
    %s25 = sphi 0, %s24
    %s41 = sphi 0, %s25
    %s45 = sphi 0, %s45
    %s47 = sphi 0, %s45
    %s48 = sphi 0, %s47
    %s62 = sphi 0, %s48
    %s68 = sphi 0, %s70
    %s71 = sphi 0, %s68
    %s72 = sphi 0, %s71
    %s88 = sphi 0, %s72
    %s94 = sphi 0, %s96
    %s97 = sphi 0, %s94
    %s98 = sphi 0, %s97
    %s114 = sphi 0, %s98
    %s120 = sphi 0, %s122
    %s123 = sphi 0, %s120
    %s124 = sphi 0, %s123
    %s140 = sphi 0, %s124
    %s146 = sphi 0, %s148
    %s149 = sphi 0, %s146
    %s150 = sphi 0, %s149
    %s166 = sphi 0, %s150
  $region4: #{tpu_custom_call.1} parent=0 // loop_header_branch
    %14 = sbr.rel (%p12) target = $region8
  $region5: #{tpu_custom_call.1} parent=0 // loop_body
    %s16 = ssub.s32 %s11, 1
    %s17 = ssub.s32 %s11, 2
    %s18 = sadd.s32 %s11, 1
    %s19 = ssub.s32 %s11, %s18
    %p20 = scmp.eq.s32.totalorder %s19, 0
    %s22 = sadd.s32 %s21, 1
    %s23 = scalar_select %p20, %s21, %s22
    %p26 = pneg %p20
    %p27 = scmp.eq.s32.totalorder %s11, 1
    %p28 = por %p26, %p27
    %p29 = scmp.ne.s32.totalorder %s21, %s24
    %p30 = scmp.eq.s32.totalorder %s11, 0
    %p31 = por %p29, %p30
    %p32 = scmp.ne.s32.totalorder %s21, %s24
    %p33 = scmp.eq.s32.totalorder %s16, 1
    %p34 = por %p32, %p33
    %p35 = scmp.ne.s32.totalorder %s24, %s25
    %p36 = scmp.eq.s32.totalorder %s16, 0
    %p37 = por %p35, %p36
    %p38 = scmp.ne.s32.totalorder %s24, %s25
    %p39 = scmp.eq.s32.totalorder %s17, 1
    %p40 = por %p38, %p39
    %p42 = scmp.ne.s32.totalorder %s25, %s41
    %p43 = scmp.eq.s32.totalorder %s17, 0
    %p44 = por %p42, %p43
    %s46 = sadd.s32 %s45, 1
    %p49 = scmp.eq.s32.totalorder %s11, 1
    %p50 = scmp.ne.s32.totalorder %s45, %s47
    %p51 = scmp.eq.s32.totalorder %s11, 0
    %p52 = por %p50, %p51
    %p53 = scmp.ne.s32.totalorder %s45, %s47
    %p54 = scmp.eq.s32.totalorder %s16, 1
    %p55 = por %p53, %p54
    %p56 = scmp.ne.s32.totalorder %s47, %s48
    %p57 = scmp.eq.s32.totalorder %s16, 0
    %p58 = por %p56, %p57
    %p59 = scmp.ne.s32.totalorder %s47, %s48
    %p60 = scmp.eq.s32.totalorder %s17, 1
    %p61 = por %p59, %p60
    %p63 = scmp.ne.s32.totalorder %s48, %s62
    %p64 = scmp.eq.s32.totalorder %s17, 0
    %p65 = por %p63, %p64
    %s66 = ssub.s32 %s11, %s18
    %p67 = scmp.eq.s32.totalorder %s66, 0
    %s69 = sadd.s32 %s68, 1
    %s70 = scalar_select %p67, %s68, %s69
    %p73 = pneg %p67
    %p74 = scmp.eq.s32.totalorder %s11, 1
    %p75 = por %p73, %p74
    %p76 = scmp.ne.s32.totalorder %s68, %s71
    %p77 = scmp.eq.s32.totalorder %s11, 0
    %p78 = por %p76, %p77
    %p79 = scmp.ne.s32.totalorder %s68, %s71
    %p80 = scmp.eq.s32.totalorder %s16, 1
    %p81 = por %p79, %p80
    %p82 = scmp.ne.s32.totalorder %s71, %s72
    %p83 = scmp.eq.s32.totalorder %s16, 0
    %p84 = por %p82, %p83
    %p85 = scmp.ne.s32.totalorder %s71, %s72
    %p86 = scmp.eq.s32.totalorder %s17, 1
    %p87 = por %p85, %p86
    %p89 = scmp.ne.s32.totalorder %s72, %s88
    %p90 = scmp.eq.s32.totalorder %s17, 0
    %p91 = por %p89, %p90
    %s92 = ssub.s32 %s11, %s18
    %p93 = scmp.eq.s32.totalorder %s92, 0
    %s95 = sadd.s32 %s94, 1
    %s96 = scalar_select %p93, %s94, %s95
    %p99 = pneg %p93
    %p100 = scmp.eq.s32.totalorder %s11, 1
    %p101 = por %p99, %p100
    %p102 = scmp.ne.s32.totalorder %s94, %s97
    %p103 = scmp.eq.s32.totalorder %s11, 0
    %p104 = por %p102, %p103
    %p105 = scmp.ne.s32.totalorder %s94, %s97
    %p106 = scmp.eq.s32.totalorder %s16, 1
    %p107 = por %p105, %p106
    %p108 = scmp.ne.s32.totalorder %s97, %s98
    %p109 = scmp.eq.s32.totalorder %s16, 0
    %p110 = por %p108, %p109
    %p111 = scmp.ne.s32.totalorder %s97, %s98
    %p112 = scmp.eq.s32.totalorder %s17, 1
    %p113 = por %p111, %p112
    %p115 = scmp.ne.s32.totalorder %s98, %s114
    %p116 = scmp.eq.s32.totalorder %s17, 0
    %p117 = por %p115, %p116
    %s118 = ssub.s32 %s11, %s18
    %p119 = scmp.eq.s32.totalorder %s118, 0
    %s121 = sadd.s32 %s120, 1
    %s122 = scalar_select %p119, %s120, %s121
    %p125 = pneg %p119
    %p126 = scmp.eq.s32.totalorder %s11, 1
    %p127 = por %p125, %p126
    %p128 = scmp.ne.s32.totalorder %s120, %s123
    %p129 = scmp.eq.s32.totalorder %s11, 0
    %p130 = por %p128, %p129
    %p131 = scmp.ne.s32.totalorder %s120, %s123
    %p132 = scmp.eq.s32.totalorder %s16, 1
    %p133 = por %p131, %p132
    %p134 = scmp.ne.s32.totalorder %s123, %s124
    %p135 = scmp.eq.s32.totalorder %s16, 0
    %p136 = por %p134, %p135
    %p137 = scmp.ne.s32.totalorder %s123, %s124
    %p138 = scmp.eq.s32.totalorder %s17, 1
    %p139 = por %p137, %p138
    %p141 = scmp.ne.s32.totalorder %s124, %s140
    %p142 = scmp.eq.s32.totalorder %s17, 0
    %p143 = por %p141, %p142
    %s144 = ssub.s32 %s11, %s18
    %p145 = scmp.eq.s32.totalorder %s144, 0
    %s147 = sadd.s32 %s146, 1
    %s148 = scalar_select %p145, %s146, %s147
    %p151 = pneg %p145
    %p152 = scmp.eq.s32.totalorder %s11, 1
    %p153 = por %p151, %p152
    %p154 = scmp.ne.s32.totalorder %s146, %s149
    %p155 = scmp.eq.s32.totalorder %s11, 0
    %p156 = por %p154, %p155
    %p157 = scmp.ne.s32.totalorder %s146, %s149
    %p158 = scmp.eq.s32.totalorder %s16, 1
    %p159 = por %p157, %p158
    %p160 = scmp.ne.s32.totalorder %s149, %s150
    %p161 = scmp.eq.s32.totalorder %s16, 0
    %p162 = por %p160, %p161
    %p163 = scmp.ne.s32.totalorder %s149, %s150
    %p164 = scmp.eq.s32.totalorder %s17, 1
    %p165 = por %p163, %p164
    %p167 = scmp.ne.s32.totalorder %s150, %s166
    %p168 = scmp.eq.s32.totalorder %s17, 0
    %p169 = por %p167, %p168
    %p170 = scmp.le.s32.totalorder 1, %s11
    %p171 = scmp.lt.s32.totalorder %s11, 3
    %p172 = pnand %p170, %p171
    %p173 = pneg %p172
    // Predicated region
    $region9: #{tpu_custom_call.1} parent=5 // pred_check
      _
    $region10: #{tpu_custom_call.1} parent=5 // pred_check_branch
      %175 = sbr.rel (%p172) target = $region12
    $region11: #{tpu_custom_call.1} parent=5 // pred_region
      %s176 = ssub.s32 %s11, 1
      // Predicated region
      $region13: #{tpu_custom_call.1} parent=11 // pred_check
        %p177 = pneg %p58
      $region14: #{tpu_custom_call.1} parent=11 // pred_check_branch
        %179 = sbr.rel (%p177) target = $region16
      $region15: #{tpu_custom_call.1} parent=11 // pred_region
        _
      $region16: #{tpu_custom_call.1} parent=11 // pred_fallthru
        _
    $region12: #{tpu_custom_call.1} parent=5 // pred_fallthru
      _
    %p180 = scmp.lt.s32.totalorder %s11, 2
    // Predicated region
    $region17: #{tpu_custom_call.1} parent=5 // pred_check
      %p181 = pneg %p180
    $region18: #{tpu_custom_call.1} parent=5 // pred_check_branch
      %183 = sbr.rel (%p181) target = $region20
    $region19: #{tpu_custom_call.1} parent=5 // pred_region
      // Predicated region
      $region21: #{tpu_custom_call.1} parent=19 // pred_check
        %p184 = pneg %p31
      $region22: #{tpu_custom_call.1} parent=19 // pred_check_branch
        %186 = sbr.rel (%p184) target = $region24
      $region23: #{tpu_custom_call.1} parent=19 // pred_region
        %s187 = smul.u32 12, %s11
        %p188 = scmp.lt.s32.totalorder %s187, 23
        %s189 = scalar_select %p188, %s187, 23
        %s190 = smul.addr %s189, 9
        %s191 = smul.addr %s190, 4
        %s192 = scalar_lea.vmem %s0, %s191
        %s193 = smul.u32 12, %s11
      $region24: #{tpu_custom_call.1} parent=19 // pred_fallthru
        _
      // Predicated region
      $region25: #{tpu_custom_call.1} parent=19 // pred_check
        %p194 = pneg %p78
      $region26: #{tpu_custom_call.1} parent=19 // pred_check_branch
        %196 = sbr.rel (%p194) target = $region28
      $region27: #{tpu_custom_call.1} parent=19 // pred_region
        %s197 = smul.u32 12, %s11
        %p198 = scmp.lt.s32.totalorder %s197, 23
        %s199 = scalar_select %p198, %s197, 23
        %s200 = smul.addr %s199, 8
        %s201 = scalar_lea.vmem %s2, %s200
        %s202 = smul.u32 12, %s11
      $region28: #{tpu_custom_call.1} parent=19 // pred_fallthru
        _
      // Predicated region
      $region29: #{tpu_custom_call.1} parent=19 // pred_check
        %p203 = pneg %p104
      $region30: #{tpu_custom_call.1} parent=19 // pred_check_branch
        %205 = sbr.rel (%p203) target = $region32
      $region31: #{tpu_custom_call.1} parent=19 // pred_region
        %s206 = smul.u32 12, %s11
        %p207 = scmp.lt.s32.totalorder %s206, 23
        %s208 = scalar_select %p207, %s206, 23
        %s209 = smul.addr %s208, 8
        %s210 = scalar_lea.vmem %s3, %s209
        %s211 = smul.u32 12, %s11
      $region32: #{tpu_custom_call.1} parent=19 // pred_fallthru
        _
      // Predicated region
      $region33: #{tpu_custom_call.1} parent=19 // pred_check
        %p212 = pneg %p130
      $region34: #{tpu_custom_call.1} parent=19 // pred_check_branch
        %214 = sbr.rel (%p212) target = $region36
      $region35: #{tpu_custom_call.1} parent=19 // pred_region
        %s215 = smul.u32 12, %s11
        %p216 = scmp.lt.s32.totalorder %s215, 23
        %s217 = scalar_select %p216, %s215, 23
        %s218 = smul.addr %s217, 8
        %s219 = scalar_lea.vmem %s4, %s218
        %s220 = smul.u32 12, %s11
      $region36: #{tpu_custom_call.1} parent=19 // pred_fallthru
        _
    $region20: #{tpu_custom_call.1} parent=5 // pred_fallthru
      _
    %p221 = scmp.le.s32.totalorder 1, %s11
    %p222 = scmp.lt.s32.totalorder %s11, 3
    %p223 = pnand %p221, %p222
    %p224 = pneg %p223
    // Predicated region
    $region37: #{tpu_custom_call.1} parent=5 // pred_check
      _
    $region38: #{tpu_custom_call.1} parent=5 // pred_check_branch
      %226 = sbr.rel (%p223) target = $region40
    $region39: #{tpu_custom_call.1} parent=5 // pred_region
      %s227 = ssub.s32 %s11, 1
      %s228 = smul.u32 12, %s16
      %p229 = scmp.lt.s32.totalorder %s228, 23
      %s230 = scalar_select %p229, %s228, 23
      %s231 = smul.addr %s230, 9
      %s232 = smul.addr %s231, 4
      %s233 = scalar_lea.vmem %s0, %s232
      %p234 = pneg %p37
      %p235 = pneg %p34
      %p236 = pneg %p58
      %p237 = pneg %p55
      %s238 = smul.u32 12, %s16
      %p239 = scmp.lt.s32.totalorder %s238, 23
      %s240 = scalar_select %p239, %s238, 23
      %s241 = smul.addr %s240, 8
      %s242 = scalar_lea.vmem %s2, %s241
      %p243 = pneg %p84
      %p244 = pneg %p81
      %s245 = smul.u32 12, %s16
      %p246 = scmp.lt.s32.totalorder %s245, 23
      %s247 = scalar_select %p246, %s245, 23
      %s248 = smul.addr %s247, 8
      %s249 = scalar_lea.vmem %s3, %s248
      %p250 = pneg %p110
      %p251 = pneg %p107
      %s252 = smul.u32 12, %s16
      %p253 = scmp.lt.s32.totalorder %s252, 23
      %s254 = scalar_select %p253, %s252, 23
      %s255 = smul.addr %s254, 8
      %s256 = scalar_lea.vmem %s4, %s255
      %p257 = pneg %p136
      %p258 = pneg %p133
      %p259 = pneg %p162
      %p260 = pneg %p159
      %s261 = smul.u32 12, %s16
      %p262 = scmp.lt.s32.totalorder %s261, 23
      %s263 = scalar_select %p262, %s261, 23
      %s264 = smul.addr %s263, 8
      %s265 = scalar_lea.vmem %s5, %s264
      %s266 = smul.u32 12, %s16
      %p267 = scmp.lt.s32.totalorder %s266, 23
      %s268 = scalar_select %p267, %s266, 23
      %s269 = smul.addr %s268, 9
      %s270 = smul.addr %s269, 4
      %s271 = scalar_lea.vmem %s0, %s270
      %s272 = smul.u32 12, %s16
      %s273 = smul.u32 12, %s16
      %p274 = scmp.lt.s32.totalorder %s273, 23
      %s275 = scalar_select %p274, %s273, 23
      %s276 = smul.addr %s275, 8
      %s277 = scalar_lea.vmem %s2, %s276
      %s278 = smul.u32 12, %s16
      %s279 = smul.u32 12, %s16
      %p280 = scmp.lt.s32.totalorder %s279, 23
      %s281 = scalar_select %p280, %s279, 23
      %s282 = smul.addr %s281, 8
      %s283 = scalar_lea.vmem %s3, %s282
      %s284 = smul.u32 12, %s16
      %s285 = smul.u32 12, %s16
      %p286 = scmp.lt.s32.totalorder %s285, 23
      %s287 = scalar_select %p286, %s285, 23
      %s288 = smul.addr %s287, 8
      %s289 = scalar_lea.vmem %s4, %s288
      %s290 = smul.u32 12, %s16
      %s291 = smul.u32 12, %s16
      %p292 = scmp.lt.s32.totalorder %s291, 23
      %s293 = scalar_select %p292, %s291, 23
      %s294 = smul.addr %s293, 8
      %s295 = scalar_lea.vmem %s5, %s294
      %s296 = smul.u32 12, %s16
      %v297 = vld [vmem:[%s271] sm:$0xff]
      %v298 = vld [vmem:[%s271 + $0x8] sm:$0xff]
      %v299 = vld [vmem:[%s271 + $0x10] sm:$0xff]
      %v300 = vld [vmem:[%s271 + $0x18] sm:$0xff]
      %v301 = vld [vmem:[%s271 + $0x20] sm:$0xf]
      %v302 = vld [vmem:[%s271 + $0x24] sm:$0xff]
      %v303 = vld [vmem:[%s271 + $0x2c] sm:$0xff]
      %v304 = vld [vmem:[%s271 + $0x34] sm:$0xff]
      %v305 = vld [vmem:[%s271 + $0x3c] sm:$0xff]
      %v306 = vld [vmem:[%s271 + $0x44] sm:$0xf]
      %v307 = vld [vmem:[%s271 + $0x48] sm:$0xff]
      %v308 = vld [vmem:[%s271 + $0x50] sm:$0xff]
      %v309 = vld [vmem:[%s271 + $0x58] sm:$0xff]
      %v310 = vld [vmem:[%s271 + $0x60] sm:$0xff]
      %v311 = vld [vmem:[%s271 + $0x68] sm:$0xf]
      %v312 = vld [vmem:[%s271 + $0x6c] sm:$0xff]
      %v313 = vld [vmem:[%s271 + $0x74] sm:$0xff]
      %v314 = vld [vmem:[%s271 + $0x7c] sm:$0xff]
      %v315 = vld [vmem:[%s271 + $0x84] sm:$0xff]
      %v316 = vld [vmem:[%s271 + $0x8c] sm:$0xf]
      %v317 = vld [vmem:[%s271 + $0x90] sm:$0xff]
      %v318 = vld [vmem:[%s271 + $0x98] sm:$0xff]
      %v319 = vld [vmem:[%s271 + $0xa0] sm:$0xff]
      %v320 = vld [vmem:[%s271 + $0xa8] sm:$0xff]
      %v321 = vld [vmem:[%s271 + $0xb0] sm:$0xf]
      %v322 = vld [vmem:[%s271 + $0xb4] sm:$0xff]
      %v323 = vld [vmem:[%s271 + $0xbc] sm:$0xff]
      %v324 = vld [vmem:[%s271 + $0xc4] sm:$0xff]
      %v325 = vld [vmem:[%s271 + $0xcc] sm:$0xff]
      %v326 = vld [vmem:[%s271 + $0xd4] sm:$0xf]
      %v327 = vld [vmem:[%s271 + $0xd8] sm:$0xff]
      %v328 = vld [vmem:[%s271 + $0xe0] sm:$0xff]
      %v329 = vld [vmem:[%s271 + $0xe8] sm:$0xff]
      %v330 = vld [vmem:[%s271 + $0xf0] sm:$0xff]
      %v331 = vld [vmem:[%s271 + $0xf8] sm:$0xf]
      %v332 = vld [vmem:[%s271 + $0xfc] sm:$0xff]
      %v333 = vld [vmem:[%s271 + $0x104] sm:$0xff]
      %v334 = vld [vmem:[%s271 + $0x10c] sm:$0xff]
      %v335 = vld [vmem:[%s271 + $0x114] sm:$0xff]
      %v336 = vld [vmem:[%s271 + $0x11c] sm:$0xf]
      %v337 = vld [vmem:[%s271 + $0x120] sm:$0xff]
      %v338 = vld [vmem:[%s271 + $0x128] sm:$0xff]
      %v339 = vld [vmem:[%s271 + $0x130] sm:$0xff]
      %v340 = vld [vmem:[%s271 + $0x138] sm:$0xff]
      %v341 = vld [vmem:[%s271 + $0x140] sm:$0xf]
      %v342 = vld [vmem:[%s271 + $0x144] sm:$0xff]
      %v343 = vld [vmem:[%s271 + $0x14c] sm:$0xff]
      %v344 = vld [vmem:[%s271 + $0x154] sm:$0xff]
      %v345 = vld [vmem:[%s271 + $0x15c] sm:$0xff]
      %v346 = vld [vmem:[%s271 + $0x164] sm:$0xf]
      %v347 = vld [vmem:[%s271 + $0x168] sm:$0xff]
      %v348 = vld [vmem:[%s271 + $0x170] sm:$0xff]
      %v349 = vld [vmem:[%s271 + $0x178] sm:$0xff]
      %v350 = vld [vmem:[%s271 + $0x180] sm:$0xff]
      %v351 = vld [vmem:[%s271 + $0x188] sm:$0xf]
      %v352 = vld [vmem:[%s271 + $0x18c] sm:$0xff]
      %v353 = vld [vmem:[%s271 + $0x194] sm:$0xff]
      %v354 = vld [vmem:[%s271 + $0x19c] sm:$0xff]
      %v355 = vld [vmem:[%s271 + $0x1a4] sm:$0xff]
      %v356 = vld [vmem:[%s271 + $0x1ac] sm:$0xf]
      %v357 = vunpack.c.l.bf16 %v297
      %v358 = vunpack.c.h.bf16 %v297
      %v359 = vunpack.c.l.bf16 %v298
      %v360 = vunpack.c.h.bf16 %v298
      %v361 = vunpack.c.l.bf16 %v299
      %v362 = vunpack.c.h.bf16 %v299
      %v363 = vunpack.c.l.bf16 %v300
      %v364 = vunpack.c.h.bf16 %v300
      %v365 = vunpack.c.l.bf16 %v301
      %v366 = vunpack.c.l.bf16 %v302
      %v367 = vunpack.c.h.bf16 %v302
      %v368 = vunpack.c.l.bf16 %v303
      %v369 = vunpack.c.h.bf16 %v303
      %v370 = vunpack.c.l.bf16 %v304
      %v371 = vunpack.c.h.bf16 %v304
      %v372 = vunpack.c.l.bf16 %v305
      %v373 = vunpack.c.h.bf16 %v305
      %v374 = vunpack.c.l.bf16 %v306
      %v375 = vunpack.c.l.bf16 %v307
      %v376 = vunpack.c.h.bf16 %v307
      %v377 = vunpack.c.l.bf16 %v308
      %v378 = vunpack.c.h.bf16 %v308
      %v379 = vunpack.c.l.bf16 %v309
      %v380 = vunpack.c.h.bf16 %v309
      %v381 = vunpack.c.l.bf16 %v310
      %v382 = vunpack.c.h.bf16 %v310
      %v383 = vunpack.c.l.bf16 %v311
      %v384 = vunpack.c.l.bf16 %v312
      %v385 = vunpack.c.h.bf16 %v312
      %v386 = vunpack.c.l.bf16 %v313
      %v387 = vunpack.c.h.bf16 %v313
      %v388 = vunpack.c.l.bf16 %v314
      %v389 = vunpack.c.h.bf16 %v314
      %v390 = vunpack.c.l.bf16 %v315
      %v391 = vunpack.c.h.bf16 %v315
      %v392 = vunpack.c.l.bf16 %v316
      %v393 = vunpack.c.l.bf16 %v317
      %v394 = vunpack.c.h.bf16 %v317
      %v395 = vunpack.c.l.bf16 %v318
      %v396 = vunpack.c.h.bf16 %v318
      %v397 = vunpack.c.l.bf16 %v319
      %v398 = vunpack.c.h.bf16 %v319
      %v399 = vunpack.c.l.bf16 %v320
      %v400 = vunpack.c.h.bf16 %v320
      %v401 = vunpack.c.l.bf16 %v321
      %v402 = vunpack.c.l.bf16 %v322
      %v403 = vunpack.c.h.bf16 %v322
      %v404 = vunpack.c.l.bf16 %v323
      %v405 = vunpack.c.h.bf16 %v323
      %v406 = vunpack.c.l.bf16 %v324
      %v407 = vunpack.c.h.bf16 %v324
      %v408 = vunpack.c.l.bf16 %v325
      %v409 = vunpack.c.h.bf16 %v325
      %v410 = vunpack.c.l.bf16 %v326
      %v411 = vunpack.c.l.bf16 %v327
      %v412 = vunpack.c.h.bf16 %v327
      %v413 = vunpack.c.l.bf16 %v328
      %v414 = vunpack.c.h.bf16 %v328
      %v415 = vunpack.c.l.bf16 %v329
      %v416 = vunpack.c.h.bf16 %v329
      %v417 = vunpack.c.l.bf16 %v330
      %v418 = vunpack.c.h.bf16 %v330
      %v419 = vunpack.c.l.bf16 %v331
      %v420 = vunpack.c.l.bf16 %v332
      %v421 = vunpack.c.h.bf16 %v332
      %v422 = vunpack.c.l.bf16 %v333
      %v423 = vunpack.c.h.bf16 %v333
      %v424 = vunpack.c.l.bf16 %v334
      %v425 = vunpack.c.h.bf16 %v334
      %v426 = vunpack.c.l.bf16 %v335
      %v427 = vunpack.c.h.bf16 %v335
      %v428 = vunpack.c.l.bf16 %v336
      %v429 = vunpack.c.l.bf16 %v337
      %v430 = vunpack.c.h.bf16 %v337
      %v431 = vunpack.c.l.bf16 %v338
      %v432 = vunpack.c.h.bf16 %v338
      %v433 = vunpack.c.l.bf16 %v339
      %v434 = vunpack.c.h.bf16 %v339
      %v435 = vunpack.c.l.bf16 %v340
      %v436 = vunpack.c.h.bf16 %v340
      %v437 = vunpack.c.l.bf16 %v341
      %v438 = vunpack.c.l.bf16 %v342
      %v439 = vunpack.c.h.bf16 %v342
      %v440 = vunpack.c.l.bf16 %v343
      %v441 = vunpack.c.h.bf16 %v343
      %v442 = vunpack.c.l.bf16 %v344
      %v443 = vunpack.c.h.bf16 %v344
      %v444 = vunpack.c.l.bf16 %v345
      %v445 = vunpack.c.h.bf16 %v345
      %v446 = vunpack.c.l.bf16 %v346
      %v447 = vunpack.c.l.bf16 %v347
      %v448 = vunpack.c.h.bf16 %v347
      %v449 = vunpack.c.l.bf16 %v348
      %v450 = vunpack.c.h.bf16 %v348
      %v451 = vunpack.c.l.bf16 %v349
      %v452 = vunpack.c.h.bf16 %v349
      %v453 = vunpack.c.l.bf16 %v350
      %v454 = vunpack.c.h.bf16 %v350
      %v455 = vunpack.c.l.bf16 %v351
      %v456 = vunpack.c.l.bf16 %v352
      %v457 = vunpack.c.h.bf16 %v352
      %v458 = vunpack.c.l.bf16 %v353
      %v459 = vunpack.c.h.bf16 %v353
      %v460 = vunpack.c.l.bf16 %v354
      %v461 = vunpack.c.h.bf16 %v354
      %v462 = vunpack.c.l.bf16 %v355
      %v463 = vunpack.c.h.bf16 %v355
      %v464 = vunpack.c.l.bf16 %v356
      %v465 = vld [vmem:[%s1] sm:$0xff]
      %v466 = vld [vmem:[%s1 + $0x8] sm:$0xff]
      %v467 = vld [vmem:[%s1 + $0x10] sm:$0xff]
      %v468 = vld [vmem:[%s1 + $0x18] sm:$0xff]
      %v469 = vld [vmem:[%s1 + $0x20] sm:$0xff]
      %v470 = vld [vmem:[%s1 + $0x28] sm:$0xff]
      %v471 = vld [vmem:[%s1 + $0x30] sm:$0xff]
      %v472 = vld [vmem:[%s1 + $0x38] sm:$0xff]
      %v473 = vld [vmem:[%s1 + $0x40] sm:$0xff]
      %v474 = vld [vmem:[%s1 + $0x48] sm:$0xff]
      %v475 = vld [vmem:[%s1 + $0x50] sm:$0xff]
      %v476 = vld [vmem:[%s1 + $0x58] sm:$0xff]
      %v477 = vld [vmem:[%s1 + $0x60] sm:$0xff]
      %v478 = vld [vmem:[%s1 + $0x68] sm:$0xff]
      %v479 = vld [vmem:[%s1 + $0x70] sm:$0xff]
      %v480 = vld [vmem:[%s1 + $0x78] sm:$0xff]
      %v481 = vld [vmem:[%s1 + $0x80] sm:$0xff]
      %v482 = vld [vmem:[%s1 + $0x88] sm:$0xff]
      %v483 = vld [vmem:[%s1 + $0x90] sm:$0xff]
      %v484 = vld [vmem:[%s1 + $0x98] sm:$0xff]
      %v485 = vld [vmem:[%s1 + $0xa0] sm:$0xff]
      %v486 = vld [vmem:[%s1 + $0xa8] sm:$0xff]
      %v487 = vld [vmem:[%s1 + $0xb0] sm:$0xff]
      %v488 = vld [vmem:[%s1 + $0xb8] sm:$0xff]
      %v489 = vld [vmem:[%s1 + $0xc0] sm:$0xff]
      %v490 = vld [vmem:[%s1 + $0xc8] sm:$0xff]
      %v491 = vld [vmem:[%s1 + $0xd0] sm:$0xff]
      %v492 = vld [vmem:[%s1 + $0xd8] sm:$0xff]
      %v493 = vld [vmem:[%s1 + $0xe0] sm:$0xff]
      %v494 = vld [vmem:[%s1 + $0xe8] sm:$0xff]
      %v495 = vld [vmem:[%s1 + $0xf0] sm:$0xff]
      %v496 = vld [vmem:[%s1 + $0xf8] sm:$0xff]
      %v497 = vld [vmem:[%s1 + $0x100] sm:$0xff]
      %v498 = vld [vmem:[%s1 + $0x108] sm:$0xff]
      %v499 = vld [vmem:[%s1 + $0x110] sm:$0xff]
      %v500 = vld [vmem:[%s1 + $0x118] sm:$0xff]
      %v501 = vld [vmem:[%s1 + $0x120] sm:$0xff]
      %v502 = vld [vmem:[%s1 + $0x128] sm:$0xff]
      %v503 = vld [vmem:[%s1 + $0x130] sm:$0xff]
      %v504 = vld [vmem:[%s1 + $0x138] sm:$0xff]
      %v505 = vld [vmem:[%s1 + $0x140] sm:$0xff]
      %v506 = vld [vmem:[%s1 + $0x148] sm:$0xff]
      %v507 = vld [vmem:[%s1 + $0x150] sm:$0xff]
      %v508 = vld [vmem:[%s1 + $0x158] sm:$0xff]
      %v509 = vld [vmem:[%s1 + $0x160] sm:$0xff]
      %v510 = vld [vmem:[%s1 + $0x168] sm:$0xff]
      %v511 = vld [vmem:[%s1 + $0x170] sm:$0xff]
      %v512 = vld [vmem:[%s1 + $0x178] sm:$0xff]
      %v513 = vld [vmem:[%s1 + $0x180] sm:$0xff]
      %v514 = vld [vmem:[%s1 + $0x188] sm:$0xff]
      %v515 = vld [vmem:[%s1 + $0x190] sm:$0xff]
      %v516 = vld [vmem:[%s1 + $0x198] sm:$0xff]
      %v517 = vld [vmem:[%s1 + $0x1a0] sm:$0xff]
      %v518 = vld [vmem:[%s1 + $0x1a8] sm:$0xff]
      %v519 = vld [vmem:[%s1 + $0x1b0] sm:$0xff]
      %v520 = vld [vmem:[%s1 + $0x1b8] sm:$0xff]
      %v521 = vld [vmem:[%s1 + $0x1c0] sm:$0xff]
      %v522 = vld [vmem:[%s1 + $0x1c8] sm:$0xff]
      %v523 = vld [vmem:[%s1 + $0x1d0] sm:$0xff]
      %v524 = vld [vmem:[%s1 + $0x1d8] sm:$0xff]
      %v525 = vld [vmem:[%s1 + $0x1e0] sm:$0xff]
      %v526 = vld [vmem:[%s1 + $0x1e8] sm:$0xff]
      %v527 = vld [vmem:[%s1 + $0x1f0] sm:$0xff]
      %v528 = vld [vmem:[%s1 + $0x1f8] sm:$0xff]
      %v529 = vld [vmem:[%s1 + $0x200] sm:$0xff]
      %v530 = vld [vmem:[%s1 + $0x208] sm:$0xff]
      %v531 = vld [vmem:[%s1 + $0x210] sm:$0xff]
      %v532 = vld [vmem:[%s1 + $0x218] sm:$0xff]
      %v533 = vld [vmem:[%s1 + $0x220] sm:$0xff]
      %v534 = vld [vmem:[%s1 + $0x228] sm:$0xff]
      %v535 = vld [vmem:[%s1 + $0x230] sm:$0xff]
      %v536 = vld [vmem:[%s1 + $0x238] sm:$0xff]
      %v537 = vld [vmem:[%s1 + $0x240] sm:$0xff]
      %v538 = vld [vmem:[%s1 + $0x248] sm:$0xff]
      %v539 = vld [vmem:[%s1 + $0x250] sm:$0xff]
      %v540 = vld [vmem:[%s1 + $0x258] sm:$0xff]
      %v541 = vld [vmem:[%s1 + $0x260] sm:$0xff]
      %v542 = vld [vmem:[%s1 + $0x268] sm:$0xff]
      %v543 = vld [vmem:[%s1 + $0x270] sm:$0xff]
      %v544 = vld [vmem:[%s1 + $0x278] sm:$0xff]
      %v545 = vld [vmem:[%s1 + $0x280] sm:$0xff]
      %v546 = vld [vmem:[%s1 + $0x288] sm:$0xff]
      %v547 = vld [vmem:[%s1 + $0x290] sm:$0xff]
      %v548 = vld [vmem:[%s1 + $0x298] sm:$0xff]
      %v549 = vld [vmem:[%s1 + $0x2a0] sm:$0xff]
      %v550 = vld [vmem:[%s1 + $0x2a8] sm:$0xff]
      %v551 = vld [vmem:[%s1 + $0x2b0] sm:$0xff]
      %v552 = vld [vmem:[%s1 + $0x2b8] sm:$0xff]
      %v553 = vld [vmem:[%s1 + $0x2c0] sm:$0xff]
      %v554 = vld [vmem:[%s1 + $0x2c8] sm:$0xff]
      %v555 = vld [vmem:[%s1 + $0x2d0] sm:$0xff]
      %v556 = vld [vmem:[%s1 + $0x2d8] sm:$0xff]
      %v557 = vld [vmem:[%s1 + $0x2e0] sm:$0xff]
      %v558 = vld [vmem:[%s1 + $0x2e8] sm:$0xff]
      %v559 = vld [vmem:[%s1 + $0x2f0] sm:$0xff]
      %v560 = vld [vmem:[%s1 + $0x2f8] sm:$0xff]
      %v561 = vld [vmem:[%s1 + $0x300] sm:$0xff]
      %v562 = vld [vmem:[%s1 + $0x308] sm:$0xff]
      %v563 = vld [vmem:[%s1 + $0x310] sm:$0xff]
      %v564 = vld [vmem:[%s1 + $0x318] sm:$0xff]
      %v565 = vld [vmem:[%s1 + $0x320] sm:$0xff]
      %v566 = vld [vmem:[%s1 + $0x328] sm:$0xff]
      %v567 = vld [vmem:[%s1 + $0x330] sm:$0xff]
      %v568 = vld [vmem:[%s1 + $0x338] sm:$0xff]
      %v569 = vld [vmem:[%s1 + $0x340] sm:$0xff]
      %v570 = vld [vmem:[%s1 + $0x348] sm:$0xff]
      %v571 = vld [vmem:[%s1 + $0x350] sm:$0xff]
      %v572 = vld [vmem:[%s1 + $0x358] sm:$0xff]
      %v573 = vld [vmem:[%s1 + $0x360] sm:$0xff]
      %v574 = vld [vmem:[%s1 + $0x368] sm:$0xff]
      %v575 = vld [vmem:[%s1 + $0x370] sm:$0xff]
      %v576 = vld [vmem:[%s1 + $0x378] sm:$0xff]
      %v577 = vld [vmem:[%s1 + $0x380] sm:$0xff]
      %v578 = vld [vmem:[%s1 + $0x388] sm:$0xff]
      %v579 = vld [vmem:[%s1 + $0x390] sm:$0xff]
      %v580 = vld [vmem:[%s1 + $0x398] sm:$0xff]
      %v581 = vld [vmem:[%s1 + $0x3a0] sm:$0xff]
      %v582 = vld [vmem:[%s1 + $0x3a8] sm:$0xff]
      %v583 = vld [vmem:[%s1 + $0x3b0] sm:$0xff]
      %v584 = vld [vmem:[%s1 + $0x3b8] sm:$0xff]
      %v585 = vld [vmem:[%s1 + $0x3c0] sm:$0xff]
      %v586 = vld [vmem:[%s1 + $0x3c8] sm:$0xff]
      %v587 = vld [vmem:[%s1 + $0x3d0] sm:$0xff]
      %v588 = vld [vmem:[%s1 + $0x3d8] sm:$0xff]
      %v589 = vld [vmem:[%s1 + $0x3e0] sm:$0xff]
      %v590 = vld [vmem:[%s1 + $0x3e8] sm:$0xff]
      %v591 = vld [vmem:[%s1 + $0x3f0] sm:$0xff]
      %v592 = vld [vmem:[%s1 + $0x3f8] sm:$0xff]
      %v593 = vld [vmem:[%s1 + $0x400] sm:$0xff]
      %v594 = vld [vmem:[%s1 + $0x408] sm:$0xff]
      %v595 = vld [vmem:[%s1 + $0x410] sm:$0xff]
      %v596 = vld [vmem:[%s1 + $0x418] sm:$0xff]
      %v597 = vld [vmem:[%s1 + $0x420] sm:$0xff]
      %v598 = vld [vmem:[%s1 + $0x428] sm:$0xff]
      %v599 = vld [vmem:[%s1 + $0x430] sm:$0xff]
      %v600 = vld [vmem:[%s1 + $0x438] sm:$0xff]
      %v601 = vld [vmem:[%s1 + $0x440] sm:$0xff]
      %v602 = vld [vmem:[%s1 + $0x448] sm:$0xff]
      %v603 = vld [vmem:[%s1 + $0x450] sm:$0xff]
      %v604 = vld [vmem:[%s1 + $0x458] sm:$0xff]
      %v605 = vld [vmem:[%s1 + $0x460] sm:$0xff]
      %v606 = vld [vmem:[%s1 + $0x468] sm:$0xff]
      %v607 = vld [vmem:[%s1 + $0x470] sm:$0xff]
      %v608 = vld [vmem:[%s1 + $0x478] sm:$0xff]
      %609 = vmatpush.msra.mxu0 %v480
      %610 = vmatpush.msra.mxu0 %v479
      %611 = vmatpush.msra.mxu0 %v478
      %612 = vmatpush.msra.mxu0 %v477
      %613 = vmatpush.msra.mxu0 %v476
      %614 = vmatpush.msra.mxu0 %v475
      %615 = vmatpush.msra.mxu0 %v474
      %616 = vmatpush.msra.mxu0 %v473
      %617 = vmatpush.msra.mxu0 %v472
      %618 = vmatpush.msra.mxu0 %v471
      %619 = vmatpush.msra.mxu0 %v470
      %620 = vmatpush.msra.mxu0 %v469
      %621 = vmatpush.msra.mxu0 %v468
      %622 = vmatpush.msra.mxu0 %v467
      %623 = vmatpush.msra.mxu0 %v466
      %624 = vmatpush.msra.mxu0 %v465
      %625 = vmatmul.f32.gmra.mxu0 %v357
      %v626 = vpop.f32.mrf.mxu0
      %v627 = vadd.f32 0.0, %v626
      %628 = vmatmul.f32.gmra.mxu0 %v366
      %v629 = vpop.f32.mrf.mxu0
      %v630 = vadd.f32 0.0, %v629
      %631 = vmatmul.f32.gmra.mxu0 %v375
      %v632 = vpop.f32.mrf.mxu0
      %v633 = vadd.f32 0.0, %v632
      %634 = vmatmul.f32.gmra.mxu0 %v384
      %v635 = vpop.f32.mrf.mxu0
      %v636 = vadd.f32 0.0, %v635
      %637 = vmatmul.f32.gmra.mxu0 %v393
      %v638 = vpop.f32.mrf.mxu0
      %v639 = vadd.f32 0.0, %v638
      %640 = vmatmul.f32.gmra.mxu0 %v402
      %v641 = vpop.f32.mrf.mxu0
      %v642 = vadd.f32 0.0, %v641
      %643 = vmatmul.f32.gmra.mxu0 %v411
      %v644 = vpop.f32.mrf.mxu0
      %v645 = vadd.f32 0.0, %v644
      %646 = vmatmul.f32.gmra.mxu0 %v420
      %v647 = vpop.f32.mrf.mxu0
      %v648 = vadd.f32 0.0, %v647
      %649 = vmatmul.f32.gmra.mxu0 %v429
      %v650 = vpop.f32.mrf.mxu0
      %v651 = vadd.f32 0.0, %v650
      %652 = vmatmul.f32.gmra.mxu0 %v438
      %v653 = vpop.f32.mrf.mxu0
      %v654 = vadd.f32 0.0, %v653
      %655 = vmatmul.f32.gmra.mxu0 %v447
      %v656 = vpop.f32.mrf.mxu0
      %v657 = vadd.f32 0.0, %v656
      %658 = vmatmul.f32.gmra.mxu0 %v456
      %v659 = vpop.f32.mrf.mxu0
      %v660 = vadd.f32 0.0, %v659
      %661 = vdwg.mxu0
      %662 = vmatpush.msra.mxu0 %v496
      %663 = vmatpush.msra.mxu0 %v495
      %664 = vmatpush.msra.mxu0 %v494
      %665 = vmatpush.msra.mxu0 %v493
      %666 = vmatpush.msra.mxu0 %v492
      %667 = vmatpush.msra.mxu0 %v491
      %668 = vmatpush.msra.mxu0 %v490
      %669 = vmatpush.msra.mxu0 %v489
      %670 = vmatpush.msra.mxu0 %v488
      %671 = vmatpush.msra.mxu0 %v487
      %672 = vmatpush.msra.mxu0 %v486
      %673 = vmatpush.msra.mxu0 %v485
      %674 = vmatpush.msra.mxu0 %v484
      %675 = vmatpush.msra.mxu0 %v483
      %676 = vmatpush.msra.mxu0 %v482
      %677 = vmatpush.msra.mxu0 %v481
      %678 = vmatmul.f32.gmra.mxu0 %v358
      %v679 = vpop.f32.mrf.mxu0
      %v680 = vadd.f32 %v627, %v679
      %681 = vmatmul.f32.gmra.mxu0 %v367
      %v682 = vpop.f32.mrf.mxu0
      %v683 = vadd.f32 %v630, %v682
      %684 = vmatmul.f32.gmra.mxu0 %v376
      %v685 = vpop.f32.mrf.mxu0
      %v686 = vadd.f32 %v633, %v685
      %687 = vmatmul.f32.gmra.mxu0 %v385
      %v688 = vpop.f32.mrf.mxu0
      %v689 = vadd.f32 %v636, %v688
      %690 = vmatmul.f32.gmra.mxu0 %v394
      %v691 = vpop.f32.mrf.mxu0
      %v692 = vadd.f32 %v639, %v691
      %693 = vmatmul.f32.gmra.mxu0 %v403
      %v694 = vpop.f32.mrf.mxu0
      %v695 = vadd.f32 %v642, %v694
      %696 = vmatmul.f32.gmra.mxu0 %v412
      %v697 = vpop.f32.mrf.mxu0
      %v698 = vadd.f32 %v645, %v697
      %699 = vmatmul.f32.gmra.mxu0 %v421
      %v700 = vpop.f32.mrf.mxu0
      %v701 = vadd.f32 %v648, %v700
      %702 = vmatmul.f32.gmra.mxu0 %v430
      %v703 = vpop.f32.mrf.mxu0
      %v704 = vadd.f32 %v651, %v703
      %705 = vmatmul.f32.gmra.mxu0 %v439
      %v706 = vpop.f32.mrf.mxu0
      %v707 = vadd.f32 %v654, %v706
      %708 = vmatmul.f32.gmra.mxu0 %v448
      %v709 = vpop.f32.mrf.mxu0
      %v710 = vadd.f32 %v657, %v709
      %711 = vmatmul.f32.gmra.mxu0 %v457
      %v712 = vpop.f32.mrf.mxu0
      %v713 = vadd.f32 %v660, %v712
      %714 = vdwg.mxu0
      %715 = vmatpush.msra.mxu0 %v512
      %716 = vmatpush.msra.mxu0 %v511
      %717 = vmatpush.msra.mxu0 %v510
      %718 = vmatpush.msra.mxu0 %v509
      %719 = vmatpush.msra.mxu0 %v508
      %720 = vmatpush.msra.mxu0 %v507
      %721 = vmatpush.msra.mxu0 %v506
      %722 = vmatpush.msra.mxu0 %v505
      %723 = vmatpush.msra.mxu0 %v504
      %724 = vmatpush.msra.mxu0 %v503
      %725 = vmatpush.msra.mxu0 %v502
      %726 = vmatpush.msra.mxu0 %v501
      %727 = vmatpush.msra.mxu0 %v500
      %728 = vmatpush.msra.mxu0 %v499
      %729 = vmatpush.msra.mxu0 %v498
      %730 = vmatpush.msra.mxu0 %v497
      %731 = vmatmul.f32.gmra.mxu0 %v359
      %v732 = vpop.f32.mrf.mxu0
      %v733 = vadd.f32 %v680, %v732
      %734 = vmatmul.f32.gmra.mxu0 %v368
      %v735 = vpop.f32.mrf.mxu0
      %v736 = vadd.f32 %v683, %v735
      %737 = vmatmul.f32.gmra.mxu0 %v377
      %v738 = vpop.f32.mrf.mxu0
      %v739 = vadd.f32 %v686, %v738
      %740 = vmatmul.f32.gmra.mxu0 %v386
      %v741 = vpop.f32.mrf.mxu0
      %v742 = vadd.f32 %v689, %v741
      %743 = vmatmul.f32.gmra.mxu0 %v395
      %v744 = vpop.f32.mrf.mxu0
      %v745 = vadd.f32 %v692, %v744
      %746 = vmatmul.f32.gmra.mxu0 %v404
      %v747 = vpop.f32.mrf.mxu0
      %v748 = vadd.f32 %v695, %v747
      %749 = vmatmul.f32.gmra.mxu0 %v413
      %v750 = vpop.f32.mrf.mxu0
      %v751 = vadd.f32 %v698, %v750
      %752 = vmatmul.f32.gmra.mxu0 %v422
      %v753 = vpop.f32.mrf.mxu0
      %v754 = vadd.f32 %v701, %v753
      %755 = vmatmul.f32.gmra.mxu0 %v431
      %v756 = vpop.f32.mrf.mxu0
      %v757 = vadd.f32 %v704, %v756
      %758 = vmatmul.f32.gmra.mxu0 %v440
      %v759 = vpop.f32.mrf.mxu0
      %v760 = vadd.f32 %v707, %v759
      %761 = vmatmul.f32.gmra.mxu0 %v449
      %v762 = vpop.f32.mrf.mxu0
      %v763 = vadd.f32 %v710, %v762
      %764 = vmatmul.f32.gmra.mxu0 %v458
      %v765 = vpop.f32.mrf.mxu0
      %v766 = vadd.f32 %v713, %v765
      %767 = vdwg.mxu0
      %768 = vmatpush.msra.mxu0 %v528
      %769 = vmatpush.msra.mxu0 %v527
      %770 = vmatpush.msra.mxu0 %v526
      %771 = vmatpush.msra.mxu0 %v525
      %772 = vmatpush.msra.mxu0 %v524
      %773 = vmatpush.msra.mxu0 %v523
      %774 = vmatpush.msra.mxu0 %v522
      %775 = vmatpush.msra.mxu0 %v521
      %776 = vmatpush.msra.mxu0 %v520
      %777 = vmatpush.msra.mxu0 %v519
      %778 = vmatpush.msra.mxu0 %v518
      %779 = vmatpush.msra.mxu0 %v517
      %780 = vmatpush.msra.mxu0 %v516
      %781 = vmatpush.msra.mxu0 %v515
      %782 = vmatpush.msra.mxu0 %v514
      %783 = vmatpush.msra.mxu0 %v513
      %784 = vmatmul.f32.gmra.mxu0 %v360
      %v785 = vpop.f32.mrf.mxu0
      %v786 = vadd.f32 %v733, %v785
      %787 = vmatmul.f32.gmra.mxu0 %v369
      %v788 = vpop.f32.mrf.mxu0
      %v789 = vadd.f32 %v736, %v788
      %790 = vmatmul.f32.gmra.mxu0 %v378
      %v791 = vpop.f32.mrf.mxu0
      %v792 = vadd.f32 %v739, %v791
      %793 = vmatmul.f32.gmra.mxu0 %v387
      %v794 = vpop.f32.mrf.mxu0
      %v795 = vadd.f32 %v742, %v794
      %796 = vmatmul.f32.gmra.mxu0 %v396
      %v797 = vpop.f32.mrf.mxu0
      %v798 = vadd.f32 %v745, %v797
      %799 = vmatmul.f32.gmra.mxu0 %v405
      %v800 = vpop.f32.mrf.mxu0
      %v801 = vadd.f32 %v748, %v800
      %802 = vmatmul.f32.gmra.mxu0 %v414
      %v803 = vpop.f32.mrf.mxu0
      %v804 = vadd.f32 %v751, %v803
      %805 = vmatmul.f32.gmra.mxu0 %v423
      %v806 = vpop.f32.mrf.mxu0
      %v807 = vadd.f32 %v754, %v806
      %808 = vmatmul.f32.gmra.mxu0 %v432
      %v809 = vpop.f32.mrf.mxu0
      %v810 = vadd.f32 %v757, %v809
      %811 = vmatmul.f32.gmra.mxu0 %v441
      %v812 = vpop.f32.mrf.mxu0
      %v813 = vadd.f32 %v760, %v812
      %814 = vmatmul.f32.gmra.mxu0 %v450
      %v815 = vpop.f32.mrf.mxu0
      %v816 = vadd.f32 %v763, %v815
      %817 = vmatmul.f32.gmra.mxu0 %v459
      %v818 = vpop.f32.mrf.mxu0
      %v819 = vadd.f32 %v766, %v818
      %820 = vdwg.mxu0
      %821 = vmatpush.msra.mxu0 %v544
      %822 = vmatpush.msra.mxu0 %v543
      %823 = vmatpush.msra.mxu0 %v542
      %824 = vmatpush.msra.mxu0 %v541
      %825 = vmatpush.msra.mxu0 %v540
      %826 = vmatpush.msra.mxu0 %v539
      %827 = vmatpush.msra.mxu0 %v538
      %828 = vmatpush.msra.mxu0 %v537
      %829 = vmatpush.msra.mxu0 %v536
      %830 = vmatpush.msra.mxu0 %v535
      %831 = vmatpush.msra.mxu0 %v534
      %832 = vmatpush.msra.mxu0 %v533
      %833 = vmatpush.msra.mxu0 %v532
      %834 = vmatpush.msra.mxu0 %v531
      %835 = vmatpush.msra.mxu0 %v530
      %836 = vmatpush.msra.mxu0 %v529
      %837 = vmatmul.f32.gmra.mxu0 %v361
      %v838 = vpop.f32.mrf.mxu0
      %v839 = vadd.f32 %v786, %v838
      %840 = vmatmul.f32.gmra.mxu0 %v370
      %v841 = vpop.f32.mrf.mxu0
      %v842 = vadd.f32 %v789, %v841
      %843 = vmatmul.f32.gmra.mxu0 %v379
      %v844 = vpop.f32.mrf.mxu0
      %v845 = vadd.f32 %v792, %v844
      %846 = vmatmul.f32.gmra.mxu0 %v388
      %v847 = vpop.f32.mrf.mxu0
      %v848 = vadd.f32 %v795, %v847
      %849 = vmatmul.f32.gmra.mxu0 %v397
      %v850 = vpop.f32.mrf.mxu0
      %v851 = vadd.f32 %v798, %v850
      %852 = vmatmul.f32.gmra.mxu0 %v406
      %v853 = vpop.f32.mrf.mxu0
      %v854 = vadd.f32 %v801, %v853
      %855 = vmatmul.f32.gmra.mxu0 %v415
      %v856 = vpop.f32.mrf.mxu0
      %v857 = vadd.f32 %v804, %v856
      %858 = vmatmul.f32.gmra.mxu0 %v424
      %v859 = vpop.f32.mrf.mxu0
      %v860 = vadd.f32 %v807, %v859
      %861 = vmatmul.f32.gmra.mxu0 %v433
      %v862 = vpop.f32.mrf.mxu0
      %v863 = vadd.f32 %v810, %v862
      %864 = vmatmul.f32.gmra.mxu0 %v442
      %v865 = vpop.f32.mrf.mxu0
      %v866 = vadd.f32 %v813, %v865
      %867 = vmatmul.f32.gmra.mxu0 %v451
      %v868 = vpop.f32.mrf.mxu0
      %v869 = vadd.f32 %v816, %v868
      %870 = vmatmul.f32.gmra.mxu0 %v460
      %v871 = vpop.f32.mrf.mxu0
      %v872 = vadd.f32 %v819, %v871
      %873 = vdwg.mxu0
      %874 = vmatpush.msra.mxu0 %v560
      %875 = vmatpush.msra.mxu0 %v559
      %876 = vmatpush.msra.mxu0 %v558
      %877 = vmatpush.msra.mxu0 %v557
      %878 = vmatpush.msra.mxu0 %v556
      %879 = vmatpush.msra.mxu0 %v555
      %880 = vmatpush.msra.mxu0 %v554
      %881 = vmatpush.msra.mxu0 %v553
      %882 = vmatpush.msra.mxu0 %v552
      %883 = vmatpush.msra.mxu0 %v551
      %884 = vmatpush.msra.mxu0 %v550
      %885 = vmatpush.msra.mxu0 %v549
      %886 = vmatpush.msra.mxu0 %v548
      %887 = vmatpush.msra.mxu0 %v547
      %888 = vmatpush.msra.mxu0 %v546
      %889 = vmatpush.msra.mxu0 %v545
      %890 = vmatmul.f32.gmra.mxu0 %v362
      %v891 = vpop.f32.mrf.mxu0
      %v892 = vadd.f32 %v839, %v891
      %893 = vmatmul.f32.gmra.mxu0 %v371
      %v894 = vpop.f32.mrf.mxu0
      %v895 = vadd.f32 %v842, %v894
      %896 = vmatmul.f32.gmra.mxu0 %v380
      %v897 = vpop.f32.mrf.mxu0
      %v898 = vadd.f32 %v845, %v897
      %899 = vmatmul.f32.gmra.mxu0 %v389
      %v900 = vpop.f32.mrf.mxu0
      %v901 = vadd.f32 %v848, %v900
      %902 = vmatmul.f32.gmra.mxu0 %v398
      %v903 = vpop.f32.mrf.mxu0
      %v904 = vadd.f32 %v851, %v903
      %905 = vmatmul.f32.gmra.mxu0 %v407
      %v906 = vpop.f32.mrf.mxu0
      %v907 = vadd.f32 %v854, %v906
      %908 = vmatmul.f32.gmra.mxu0 %v416
      %v909 = vpop.f32.mrf.mxu0
      %v910 = vadd.f32 %v857, %v909
      %911 = vmatmul.f32.gmra.mxu0 %v425
      %v912 = vpop.f32.mrf.mxu0
      %v913 = vadd.f32 %v860, %v912
      %914 = vmatmul.f32.gmra.mxu0 %v434
      %v915 = vpop.f32.mrf.mxu0
      %v916 = vadd.f32 %v863, %v915
      %917 = vmatmul.f32.gmra.mxu0 %v443
      %v918 = vpop.f32.mrf.mxu0
      %v919 = vadd.f32 %v866, %v918
      %920 = vmatmul.f32.gmra.mxu0 %v452
      %v921 = vpop.f32.mrf.mxu0
      %v922 = vadd.f32 %v869, %v921
      %923 = vmatmul.f32.gmra.mxu0 %v461
      %v924 = vpop.f32.mrf.mxu0
      %v925 = vadd.f32 %v872, %v924
      %926 = vdwg.mxu0
      %927 = vmatpush.msra.mxu0 %v576
      %928 = vmatpush.msra.mxu0 %v575
      %929 = vmatpush.msra.mxu0 %v574
      %930 = vmatpush.msra.mxu0 %v573
      %931 = vmatpush.msra.mxu0 %v572
      %932 = vmatpush.msra.mxu0 %v571
      %933 = vmatpush.msra.mxu0 %v570
      %934 = vmatpush.msra.mxu0 %v569
      %935 = vmatpush.msra.mxu0 %v568
      %936 = vmatpush.msra.mxu0 %v567
      %937 = vmatpush.msra.mxu0 %v566
      %938 = vmatpush.msra.mxu0 %v565
      %939 = vmatpush.msra.mxu0 %v564
      %940 = vmatpush.msra.mxu0 %v563
      %941 = vmatpush.msra.mxu0 %v562
      %942 = vmatpush.msra.mxu0 %v561
      %943 = vmatmul.f32.gmra.mxu0 %v363
      %v944 = vpop.f32.mrf.mxu0
      %v945 = vadd.f32 %v892, %v944
      %946 = vmatmul.f32.gmra.mxu0 %v372
      %v947 = vpop.f32.mrf.mxu0
      %v948 = vadd.f32 %v895, %v947
      %949 = vmatmul.f32.gmra.mxu0 %v381
      %v950 = vpop.f32.mrf.mxu0
      %v951 = vadd.f32 %v898, %v950
      %952 = vmatmul.f32.gmra.mxu0 %v390
      %v953 = vpop.f32.mrf.mxu0
      %v954 = vadd.f32 %v901, %v953
      %955 = vmatmul.f32.gmra.mxu0 %v399
      %v956 = vpop.f32.mrf.mxu0
      %v957 = vadd.f32 %v904, %v956
      %958 = vmatmul.f32.gmra.mxu0 %v408
      %v959 = vpop.f32.mrf.mxu0
      %v960 = vadd.f32 %v907, %v959
      %961 = vmatmul.f32.gmra.mxu0 %v417
      %v962 = vpop.f32.mrf.mxu0
      %v963 = vadd.f32 %v910, %v962
      %964 = vmatmul.f32.gmra.mxu0 %v426
      %v965 = vpop.f32.mrf.mxu0
      %v966 = vadd.f32 %v913, %v965
      %967 = vmatmul.f32.gmra.mxu0 %v435
      %v968 = vpop.f32.mrf.mxu0
      %v969 = vadd.f32 %v916, %v968
      %970 = vmatmul.f32.gmra.mxu0 %v444
      %v971 = vpop.f32.mrf.mxu0
      %v972 = vadd.f32 %v919, %v971
      %973 = vmatmul.f32.gmra.mxu0 %v453
      %v974 = vpop.f32.mrf.mxu0
      %v975 = vadd.f32 %v922, %v974
      %976 = vmatmul.f32.gmra.mxu0 %v462
      %v977 = vpop.f32.mrf.mxu0
      %v978 = vadd.f32 %v925, %v977
      %979 = vdwg.mxu0
      %980 = vmatpush.msra.mxu0 %v592
      %981 = vmatpush.msra.mxu0 %v591
      %982 = vmatpush.msra.mxu0 %v590
      %983 = vmatpush.msra.mxu0 %v589
      %984 = vmatpush.msra.mxu0 %v588
      %985 = vmatpush.msra.mxu0 %v587
      %986 = vmatpush.msra.mxu0 %v586
      %987 = vmatpush.msra.mxu0 %v585
      %988 = vmatpush.msra.mxu0 %v584
      %989 = vmatpush.msra.mxu0 %v583
      %990 = vmatpush.msra.mxu0 %v582
      %991 = vmatpush.msra.mxu0 %v581
      %992 = vmatpush.msra.mxu0 %v580
      %993 = vmatpush.msra.mxu0 %v579
      %994 = vmatpush.msra.mxu0 %v578
      %995 = vmatpush.msra.mxu0 %v577
      %996 = vmatmul.f32.gmra.mxu0 %v364
      %v997 = vpop.f32.mrf.mxu0
      %v998 = vadd.f32 %v945, %v997
      %999 = vmatmul.f32.gmra.mxu0 %v373
      %v1000 = vpop.f32.mrf.mxu0
      %v1001 = vadd.f32 %v948, %v1000
      %1002 = vmatmul.f32.gmra.mxu0 %v382
      %v1003 = vpop.f32.mrf.mxu0
      %v1004 = vadd.f32 %v951, %v1003
      %1005 = vmatmul.f32.gmra.mxu0 %v391
      %v1006 = vpop.f32.mrf.mxu0
      %v1007 = vadd.f32 %v954, %v1006
      %1008 = vmatmul.f32.gmra.mxu0 %v400
      %v1009 = vpop.f32.mrf.mxu0
      %v1010 = vadd.f32 %v957, %v1009
      %1011 = vmatmul.f32.gmra.mxu0 %v409
      %v1012 = vpop.f32.mrf.mxu0
      %v1013 = vadd.f32 %v960, %v1012
      %1014 = vmatmul.f32.gmra.mxu0 %v418
      %v1015 = vpop.f32.mrf.mxu0
      %v1016 = vadd.f32 %v963, %v1015
      %1017 = vmatmul.f32.gmra.mxu0 %v427
      %v1018 = vpop.f32.mrf.mxu0
      %v1019 = vadd.f32 %v966, %v1018
      %1020 = vmatmul.f32.gmra.mxu0 %v436
      %v1021 = vpop.f32.mrf.mxu0
      %v1022 = vadd.f32 %v969, %v1021
      %1023 = vmatmul.f32.gmra.mxu0 %v445
      %v1024 = vpop.f32.mrf.mxu0
      %v1025 = vadd.f32 %v972, %v1024
      %1026 = vmatmul.f32.gmra.mxu0 %v454
      %v1027 = vpop.f32.mrf.mxu0
      %v1028 = vadd.f32 %v975, %v1027
      %1029 = vmatmul.f32.gmra.mxu0 %v463
      %v1030 = vpop.f32.mrf.mxu0
      %v1031 = vadd.f32 %v978, %v1030
      %1032 = vdwg.mxu0
      %1033 = vmatpush.msra.mxu0 %v608
      %1034 = vmatpush.msra.mxu0 %v607
      %1035 = vmatpush.msra.mxu0 %v606
      %1036 = vmatpush.msra.mxu0 %v605
      %1037 = vmatpush.msra.mxu0 %v604
      %1038 = vmatpush.msra.mxu0 %v603
      %1039 = vmatpush.msra.mxu0 %v602
      %1040 = vmatpush.msra.mxu0 %v601
      %1041 = vmatpush.msra.mxu0 %v600
      %1042 = vmatpush.msra.mxu0 %v599
      %1043 = vmatpush.msra.mxu0 %v598
      %1044 = vmatpush.msra.mxu0 %v597
      %1045 = vmatpush.msra.mxu0 %v596
      %1046 = vmatpush.msra.mxu0 %v595
      %1047 = vmatpush.msra.mxu0 %v594
      %1048 = vmatpush.msra.mxu0 %v593
      %1049 = vmatmul.f32.gmra.mxu0 %v365
      %v1050 = vpop.f32.mrf.mxu0
      %v1051 = vadd.f32 %v998, %v1050
      %1052 = vmatmul.f32.gmra.mxu0 %v374
      %v1053 = vpop.f32.mrf.mxu0
      %v1054 = vadd.f32 %v1001, %v1053
      %1055 = vmatmul.f32.gmra.mxu0 %v383
      %v1056 = vpop.f32.mrf.mxu0
      %v1057 = vadd.f32 %v1004, %v1056
      %1058 = vmatmul.f32.gmra.mxu0 %v392
      %v1059 = vpop.f32.mrf.mxu0
      %v1060 = vadd.f32 %v1007, %v1059
      %1061 = vmatmul.f32.gmra.mxu0 %v401
      %v1062 = vpop.f32.mrf.mxu0
      %v1063 = vadd.f32 %v1010, %v1062
      %1064 = vmatmul.f32.gmra.mxu0 %v410
      %v1065 = vpop.f32.mrf.mxu0
      %v1066 = vadd.f32 %v1013, %v1065
      %1067 = vmatmul.f32.gmra.mxu0 %v419
      %v1068 = vpop.f32.mrf.mxu0
      %v1069 = vadd.f32 %v1016, %v1068
      %1070 = vmatmul.f32.gmra.mxu0 %v428
      %v1071 = vpop.f32.mrf.mxu0
      %v1072 = vadd.f32 %v1019, %v1071
      %1073 = vmatmul.f32.gmra.mxu0 %v437
      %v1074 = vpop.f32.mrf.mxu0
      %v1075 = vadd.f32 %v1022, %v1074
      %1076 = vmatmul.f32.gmra.mxu0 %v446
      %v1077 = vpop.f32.mrf.mxu0
      %v1078 = vadd.f32 %v1025, %v1077
      %1079 = vmatmul.f32.gmra.mxu0 %v455
      %v1080 = vpop.f32.mrf.mxu0
      %v1081 = vadd.f32 %v1028, %v1080
      %1082 = vmatmul.f32.gmra.mxu0 %v464
      %v1083 = vpop.f32.mrf.mxu0
      %v1084 = vadd.f32 %v1031, %v1083
      %1085 = vdwg.mxu0
      %vm1086 = vcmask 400384
      %v1087 = vsel %vm1086, %v1051, 0.0
      %1088 = vadd.xlane.f32.xlu0 %v1087
      %v1089 = vpop.xlane.xlu0 %1088
      %v1090 = vsel %vm1086, %v1054, 0.0
      %1091 = vadd.xlane.f32.xlu0 %v1090
      %v1092 = vpop.xlane.xlu0 %1091
      %v1093 = vsel %vm1086, %v1057, 0.0
      %1094 = vadd.xlane.f32.xlu0 %v1093
      %v1095 = vpop.xlane.xlu0 %1094
      %v1096 = vsel %vm1086, %v1060, 0.0
      %1097 = vadd.xlane.f32.xlu0 %v1096
      %v1098 = vpop.xlane.xlu0 %1097
      %v1099 = vsel %vm1086, %v1063, 0.0
      %1100 = vadd.xlane.f32.xlu0 %v1099
      %v1101 = vpop.xlane.xlu0 %1100
      %v1102 = vsel %vm1086, %v1066, 0.0
      %1103 = vadd.xlane.f32.xlu0 %v1102
      %v1104 = vpop.xlane.xlu0 %1103
      %v1105 = vsel %vm1086, %v1069, 0.0
      %1106 = vadd.xlane.f32.xlu0 %v1105
      %v1107 = vpop.xlane.xlu0 %1106
      %v1108 = vsel %vm1086, %v1072, 0.0
      %1109 = vadd.xlane.f32.xlu0 %v1108
      %v1110 = vpop.xlane.xlu0 %1109
      %v1111 = vsel %vm1086, %v1075, 0.0
      %1112 = vadd.xlane.f32.xlu0 %v1111
      %v1113 = vpop.xlane.xlu0 %1112
      %v1114 = vsel %vm1086, %v1078, 0.0
      %1115 = vadd.xlane.f32.xlu0 %v1114
      %v1116 = vpop.xlane.xlu0 %1115
      %v1117 = vsel %vm1086, %v1081, 0.0
      %1118 = vadd.xlane.f32.xlu0 %v1117
      %v1119 = vpop.xlane.xlu0 %1118
      %v1120 = vsel %vm1086, %v1084, 0.0
      %1121 = vadd.xlane.f32.xlu0 %v1120
      %v1122 = vpop.xlane.xlu0 %1121
      %v1123 = vmul.f32 %v1051, %v1051
      %v1124 = vmul.f32 %v1054, %v1054
      %v1125 = vmul.f32 %v1057, %v1057
      %v1126 = vmul.f32 %v1060, %v1060
      %v1127 = vmul.f32 %v1063, %v1063
      %v1128 = vmul.f32 %v1066, %v1066
      %v1129 = vmul.f32 %v1069, %v1069
      %v1130 = vmul.f32 %v1072, %v1072
      %v1131 = vmul.f32 %v1075, %v1075
      %v1132 = vmul.f32 %v1078, %v1078
      %v1133 = vmul.f32 %v1081, %v1081
      %v1134 = vmul.f32 %v1084, %v1084
      %v1135 = vsel %vm1086, %v1123, 0.0
      %1136 = vadd.xlane.f32.xlu0 %v1135
      %v1137 = vpop.xlane.xlu0 %1136
      %v1138 = vsel %vm1086, %v1124, 0.0
      %1139 = vadd.xlane.f32.xlu0 %v1138
      %v1140 = vpop.xlane.xlu0 %1139
      %v1141 = vsel %vm1086, %v1125, 0.0
      %1142 = vadd.xlane.f32.xlu0 %v1141
      %v1143 = vpop.xlane.xlu0 %1142
      %v1144 = vsel %vm1086, %v1126, 0.0
      %1145 = vadd.xlane.f32.xlu0 %v1144
      %v1146 = vpop.xlane.xlu0 %1145
      %v1147 = vsel %vm1086, %v1127, 0.0
      %1148 = vadd.xlane.f32.xlu0 %v1147
      %v1149 = vpop.xlane.xlu0 %1148
      %v1150 = vsel %vm1086, %v1128, 0.0
      %1151 = vadd.xlane.f32.xlu0 %v1150
      %v1152 = vpop.xlane.xlu0 %1151
      %v1153 = vsel %vm1086, %v1129, 0.0
      %1154 = vadd.xlane.f32.xlu0 %v1153
      %v1155 = vpop.xlane.xlu0 %1154
      %v1156 = vsel %vm1086, %v1130, 0.0
      %1157 = vadd.xlane.f32.xlu0 %v1156
      %v1158 = vpop.xlane.xlu0 %1157
      %v1159 = vsel %vm1086, %v1131, 0.0
      %1160 = vadd.xlane.f32.xlu0 %v1159
      %v1161 = vpop.xlane.xlu0 %1160
      %v1162 = vsel %vm1086, %v1132, 0.0
      %1163 = vadd.xlane.f32.xlu0 %v1162
      %v1164 = vpop.xlane.xlu0 %1163
      %v1165 = vsel %vm1086, %v1133, 0.0
      %1166 = vadd.xlane.f32.xlu0 %v1165
      %v1167 = vpop.xlane.xlu0 %1166
      %v1168 = vsel %vm1086, %v1134, 0.0
      %1169 = vadd.xlane.f32.xlu0 %v1168
      %v1170 = vpop.xlane.xlu0 %1169
      %v1171 = vmul.f32 %v1089, 0.020408163
      %v1172 = vmul.f32 %v1092, 0.020408163
      %v1173 = vmul.f32 %v1095, 0.020408163
      %v1174 = vmul.f32 %v1098, 0.020408163
      %v1175 = vmul.f32 %v1101, 0.020408163
      %v1176 = vmul.f32 %v1104, 0.020408163
      %v1177 = vmul.f32 %v1107, 0.020408163
      %v1178 = vmul.f32 %v1110, 0.020408163
      %v1179 = vmul.f32 %v1113, 0.020408163
      %v1180 = vmul.f32 %v1116, 0.020408163
      %v1181 = vmul.f32 %v1119, 0.020408163
      %v1182 = vmul.f32 %v1122, 0.020408163
      %v1183 = vmul.f32 %v1137, 0.020408163
      %v1184 = vmul.f32 %v1140, 0.020408163
      %v1185 = vmul.f32 %v1143, 0.020408163
      %v1186 = vmul.f32 %v1146, 0.020408163
      %v1187 = vmul.f32 %v1149, 0.020408163
      %v1188 = vmul.f32 %v1152, 0.020408163
      %v1189 = vmul.f32 %v1155, 0.020408163
      %v1190 = vmul.f32 %v1158, 0.020408163
      %v1191 = vmul.f32 %v1161, 0.020408163
      %v1192 = vmul.f32 %v1164, 0.020408163
      %v1193 = vmul.f32 %v1167, 0.020408163
      %v1194 = vmul.f32 %v1170, 0.020408163
      %v1195 = vmul.f32 %v1171, %v1171
      %v1196 = vmul.f32 %v1172, %v1172
      %v1197 = vmul.f32 %v1173, %v1173
      %v1198 = vmul.f32 %v1174, %v1174
      %v1199 = vmul.f32 %v1175, %v1175
      %v1200 = vmul.f32 %v1176, %v1176
      %v1201 = vmul.f32 %v1177, %v1177
      %v1202 = vmul.f32 %v1178, %v1178
      %v1203 = vmul.f32 %v1179, %v1179
      %v1204 = vmul.f32 %v1180, %v1180
      %v1205 = vmul.f32 %v1181, %v1181
      %v1206 = vmul.f32 %v1182, %v1182
      %v1207 = vsub.f32 %v1183, %v1195
      %v1208 = vsub.f32 %v1184, %v1196
      %v1209 = vsub.f32 %v1185, %v1197
      %v1210 = vsub.f32 %v1186, %v1198
      %v1211 = vsub.f32 %v1187, %v1199
      %v1212 = vsub.f32 %v1188, %v1200
      %v1213 = vsub.f32 %v1189, %v1201
      %v1214 = vsub.f32 %v1190, %v1202
      %v1215 = vsub.f32 %v1191, %v1203
      %v1216 = vsub.f32 %v1192, %v1204
      %v1217 = vsub.f32 %v1193, %v1205
      %v1218 = vsub.f32 %v1194, %v1206
      %v1219 = vadd.f32 %v1207, 1e-05
      %v1220 = vadd.f32 %v1208, 1e-05
      %v1221 = vadd.f32 %v1209, 1e-05
      %v1222 = vadd.f32 %v1210, 1e-05
      %v1223 = vadd.f32 %v1211, 1e-05
      %v1224 = vadd.f32 %v1212, 1e-05
      %v1225 = vadd.f32 %v1213, 1e-05
      %v1226 = vadd.f32 %v1214, 1e-05
      %v1227 = vadd.f32 %v1215, 1e-05
      %v1228 = vadd.f32 %v1216, 1e-05
      %v1229 = vadd.f32 %v1217, 1e-05
      %v1230 = vadd.f32 %v1218, 1e-05
      %v1231 = vrsqrt.pop %v1219
      %v1232 = vmul.f32 %v1231, %v1219
      %v1233 = vmul.f32 %v1232, %v1231
      %v1234 = vmul.f32 0.5, %v1233
      %v1235 = vsub.f32 1.5, %v1234
      %v1236 = vmul.f32 %v1231, %v1235
      %vm1237 = vweird.f32 %v1219
      %vm1238 = vweird.f32 %v1231
      %vm1239 = vmor %vm1237, %vm1238
      %v1240 = vsel %vm1239, %v1231, %v1236
      %v1241 = vrsqrt.pop %v1220
      %v1242 = vmul.f32 %v1241, %v1220
      %v1243 = vmul.f32 %v1242, %v1241
      %v1244 = vmul.f32 0.5, %v1243
      %v1245 = vsub.f32 1.5, %v1244
      %v1246 = vmul.f32 %v1241, %v1245
      %vm1247 = vweird.f32 %v1220
      %vm1248 = vweird.f32 %v1241
      %vm1249 = vmor %vm1247, %vm1248
      %v1250 = vsel %vm1249, %v1241, %v1246
      %v1251 = vrsqrt.pop %v1221
      %v1252 = vmul.f32 %v1251, %v1221
      %v1253 = vmul.f32 %v1252, %v1251
      %v1254 = vmul.f32 0.5, %v1253
      %v1255 = vsub.f32 1.5, %v1254
      %v1256 = vmul.f32 %v1251, %v1255
      %vm1257 = vweird.f32 %v1221
      %vm1258 = vweird.f32 %v1251
      %vm1259 = vmor %vm1257, %vm1258
      %v1260 = vsel %vm1259, %v1251, %v1256
      %v1261 = vrsqrt.pop %v1222
      %v1262 = vmul.f32 %v1261, %v1222
      %v1263 = vmul.f32 %v1262, %v1261
      %v1264 = vmul.f32 0.5, %v1263
      %v1265 = vsub.f32 1.5, %v1264
      %v1266 = vmul.f32 %v1261, %v1265
      %vm1267 = vweird.f32 %v1222
      %vm1268 = vweird.f32 %v1261
      %vm1269 = vmor %vm1267, %vm1268
      %v1270 = vsel %vm1269, %v1261, %v1266
      %v1271 = vrsqrt.pop %v1223
      %v1272 = vmul.f32 %v1271, %v1223
      %v1273 = vmul.f32 %v1272, %v1271
      %v1274 = vmul.f32 0.5, %v1273
      %v1275 = vsub.f32 1.5, %v1274
      %v1276 = vmul.f32 %v1271, %v1275
      %vm1277 = vweird.f32 %v1223
      %vm1278 = vweird.f32 %v1271
      %vm1279 = vmor %vm1277, %vm1278
      %v1280 = vsel %vm1279, %v1271, %v1276
      %v1281 = vrsqrt.pop %v1224
      %v1282 = vmul.f32 %v1281, %v1224
      %v1283 = vmul.f32 %v1282, %v1281
      %v1284 = vmul.f32 0.5, %v1283
      %v1285 = vsub.f32 1.5, %v1284
      %v1286 = vmul.f32 %v1281, %v1285
      %vm1287 = vweird.f32 %v1224
      %vm1288 = vweird.f32 %v1281
      %vm1289 = vmor %vm1287, %vm1288
      %v1290 = vsel %vm1289, %v1281, %v1286
      %v1291 = vrsqrt.pop %v1225
      %v1292 = vmul.f32 %v1291, %v1225
      %v1293 = vmul.f32 %v1292, %v1291
      %v1294 = vmul.f32 0.5, %v1293
      %v1295 = vsub.f32 1.5, %v1294
      %v1296 = vmul.f32 %v1291, %v1295
      %vm1297 = vweird.f32 %v1225
      %vm1298 = vweird.f32 %v1291
      %vm1299 = vmor %vm1297, %vm1298
      %v1300 = vsel %vm1299, %v1291, %v1296
      %v1301 = vrsqrt.pop %v1226
      %v1302 = vmul.f32 %v1301, %v1226
      %v1303 = vmul.f32 %v1302, %v1301
      %v1304 = vmul.f32 0.5, %v1303
      %v1305 = vsub.f32 1.5, %v1304
      %v1306 = vmul.f32 %v1301, %v1305
      %vm1307 = vweird.f32 %v1226
      %vm1308 = vweird.f32 %v1301
      %vm1309 = vmor %vm1307, %vm1308
      %v1310 = vsel %vm1309, %v1301, %v1306
      %v1311 = vrsqrt.pop %v1227
      %v1312 = vmul.f32 %v1311, %v1227
      %v1313 = vmul.f32 %v1312, %v1311
      %v1314 = vmul.f32 0.5, %v1313
      %v1315 = vsub.f32 1.5, %v1314
      %v1316 = vmul.f32 %v1311, %v1315
      %vm1317 = vweird.f32 %v1227
      %vm1318 = vweird.f32 %v1311
      %vm1319 = vmor %vm1317, %vm1318
      %v1320 = vsel %vm1319, %v1311, %v1316
      %v1321 = vrsqrt.pop %v1228
      %v1322 = vmul.f32 %v1321, %v1228
      %v1323 = vmul.f32 %v1322, %v1321
      %v1324 = vmul.f32 0.5, %v1323
      %v1325 = vsub.f32 1.5, %v1324
      %v1326 = vmul.f32 %v1321, %v1325
      %vm1327 = vweird.f32 %v1228
      %vm1328 = vweird.f32 %v1321
      %vm1329 = vmor %vm1327, %vm1328
      %v1330 = vsel %vm1329, %v1321, %v1326
      %v1331 = vrsqrt.pop %v1229
      %v1332 = vmul.f32 %v1331, %v1229
      %v1333 = vmul.f32 %v1332, %v1331
      %v1334 = vmul.f32 0.5, %v1333
      %v1335 = vsub.f32 1.5, %v1334
      %v1336 = vmul.f32 %v1331, %v1335
      %vm1337 = vweird.f32 %v1229
      %vm1338 = vweird.f32 %v1331
      %vm1339 = vmor %vm1337, %vm1338
      %v1340 = vsel %vm1339, %v1331, %v1336
      %v1341 = vrsqrt.pop %v1230
      %v1342 = vmul.f32 %v1341, %v1230
      %v1343 = vmul.f32 %v1342, %v1341
      %v1344 = vmul.f32 0.5, %v1343
      %v1345 = vsub.f32 1.5, %v1344
      %v1346 = vmul.f32 %v1341, %v1345
      %vm1347 = vweird.f32 %v1230
      %vm1348 = vweird.f32 %v1341
      %vm1349 = vmor %vm1347, %vm1348
      %v1350 = vsel %vm1349, %v1341, %v1346
      %v1351 = vld [vmem:[%s277] sm:$0xff]
      %v1352 = vld [vmem:[%s277 + $0x8] sm:$0xff]
      %v1353 = vld [vmem:[%s277 + $0x10] sm:$0xff]
      %v1354 = vld [vmem:[%s277 + $0x18] sm:$0xff]
      %v1355 = vld [vmem:[%s277 + $0x20] sm:$0xff]
      %v1356 = vld [vmem:[%s277 + $0x28] sm:$0xff]
      %v1357 = vld [vmem:[%s277 + $0x30] sm:$0xff]
      %v1358 = vld [vmem:[%s277 + $0x38] sm:$0xff]
      %v1359 = vld [vmem:[%s277 + $0x40] sm:$0xff]
      %v1360 = vld [vmem:[%s277 + $0x48] sm:$0xff]
      %v1361 = vld [vmem:[%s277 + $0x50] sm:$0xff]
      %v1362 = vld [vmem:[%s277 + $0x58] sm:$0xff]
      %v1363 = vmul.f32 %v1351, %v1240
      %v1364 = vmul.f32 %v1352, %v1250
      %v1365 = vmul.f32 %v1353, %v1260
      %v1366 = vmul.f32 %v1354, %v1270
      %v1367 = vmul.f32 %v1355, %v1280
      %v1368 = vmul.f32 %v1356, %v1290
      %v1369 = vmul.f32 %v1357, %v1300
      %v1370 = vmul.f32 %v1358, %v1310
      %v1371 = vmul.f32 %v1359, %v1320
      %v1372 = vmul.f32 %v1360, %v1330
      %v1373 = vmul.f32 %v1361, %v1340
      %v1374 = vmul.f32 %v1362, %v1350
      %v1375 = vld [vmem:[%s283] sm:$0xff]
      %v1376 = vld [vmem:[%s283 + $0x8] sm:$0xff]
      %v1377 = vld [vmem:[%s283 + $0x10] sm:$0xff]
      %v1378 = vld [vmem:[%s283 + $0x18] sm:$0xff]
      %v1379 = vld [vmem:[%s283 + $0x20] sm:$0xff]
      %v1380 = vld [vmem:[%s283 + $0x28] sm:$0xff]
      %v1381 = vld [vmem:[%s283 + $0x30] sm:$0xff]
      %v1382 = vld [vmem:[%s283 + $0x38] sm:$0xff]
      %v1383 = vld [vmem:[%s283 + $0x40] sm:$0xff]
      %v1384 = vld [vmem:[%s283 + $0x48] sm:$0xff]
      %v1385 = vld [vmem:[%s283 + $0x50] sm:$0xff]
      %v1386 = vld [vmem:[%s283 + $0x58] sm:$0xff]
      %v1387 = vmul.f32 %v1171, %v1363
      %v1388 = vmul.f32 %v1172, %v1364
      %v1389 = vmul.f32 %v1173, %v1365
      %v1390 = vmul.f32 %v1174, %v1366
      %v1391 = vmul.f32 %v1175, %v1367
      %v1392 = vmul.f32 %v1176, %v1368
      %v1393 = vmul.f32 %v1177, %v1369
      %v1394 = vmul.f32 %v1178, %v1370
      %v1395 = vmul.f32 %v1179, %v1371
      %v1396 = vmul.f32 %v1180, %v1372
      %v1397 = vmul.f32 %v1181, %v1373
      %v1398 = vmul.f32 %v1182, %v1374
      %v1399 = vsub.f32 %v1375, %v1387
      %v1400 = vsub.f32 %v1376, %v1388
      %v1401 = vsub.f32 %v1377, %v1389
      %v1402 = vsub.f32 %v1378, %v1390
      %v1403 = vsub.f32 %v1379, %v1391
      %v1404 = vsub.f32 %v1380, %v1392
      %v1405 = vsub.f32 %v1381, %v1393
      %v1406 = vsub.f32 %v1382, %v1394
      %v1407 = vsub.f32 %v1383, %v1395
      %v1408 = vsub.f32 %v1384, %v1396
      %v1409 = vsub.f32 %v1385, %v1397
      %v1410 = vsub.f32 %v1386, %v1398
      %1412 = vset.pattern.permute.xlu0 0
      %1413 = vperm.xlu0 %1412, %v1363
      %v1414 = vpop.permute.xlu0 %1413
      %1417 = vset.pattern.permute.xlu0 0
      %1418 = vperm.xlu0 %1417, %v1364
      %v1419 = vpop.permute.xlu0 %1418
      %1422 = vset.pattern.permute.xlu0 0
      %1423 = vperm.xlu0 %1422, %v1365
      %v1424 = vpop.permute.xlu0 %1423
      %1427 = vset.pattern.permute.xlu0 0
      %1428 = vperm.xlu0 %1427, %v1366
      %v1429 = vpop.permute.xlu0 %1428
      %1432 = vset.pattern.permute.xlu0 0
      %1433 = vperm.xlu0 %1432, %v1367
      %v1434 = vpop.permute.xlu0 %1433
      %1437 = vset.pattern.permute.xlu0 0
      %1438 = vperm.xlu0 %1437, %v1368
      %v1439 = vpop.permute.xlu0 %1438
      %1442 = vset.pattern.permute.xlu0 0
      %1443 = vperm.xlu0 %1442, %v1369
      %v1444 = vpop.permute.xlu0 %1443
      %1447 = vset.pattern.permute.xlu0 0
      %1448 = vperm.xlu0 %1447, %v1370
      %v1449 = vpop.permute.xlu0 %1448
      %1452 = vset.pattern.permute.xlu0 0
      %1453 = vperm.xlu0 %1452, %v1371
      %v1454 = vpop.permute.xlu0 %1453
      %1457 = vset.pattern.permute.xlu0 0
      %1458 = vperm.xlu0 %1457, %v1372
      %v1459 = vpop.permute.xlu0 %1458
      %1462 = vset.pattern.permute.xlu0 0
      %1463 = vperm.xlu0 %1462, %v1373
      %v1464 = vpop.permute.xlu0 %1463
      %1467 = vset.pattern.permute.xlu0 0
      %1468 = vperm.xlu0 %1467, %v1374
      %v1469 = vpop.permute.xlu0 %1468
      %v1471 = vmul.f32 %v1051, %v1414
      %v1472 = vmul.f32 %v1054, %v1419
      %v1473 = vmul.f32 %v1057, %v1424
      %v1474 = vmul.f32 %v1060, %v1429
      %v1475 = vmul.f32 %v1063, %v1434
      %v1476 = vmul.f32 %v1066, %v1439
      %v1477 = vmul.f32 %v1069, %v1444
      %v1478 = vmul.f32 %v1072, %v1449
      %v1479 = vmul.f32 %v1075, %v1454
      %v1480 = vmul.f32 %v1078, %v1459
      %v1481 = vmul.f32 %v1081, %v1464
      %v1482 = vmul.f32 %v1084, %v1469
      %1484 = vset.pattern.permute.xlu0 0
      %1485 = vperm.xlu0 %1484, %v1399
      %v1486 = vpop.permute.xlu0 %1485
      %1489 = vset.pattern.permute.xlu0 0
      %1490 = vperm.xlu0 %1489, %v1400
      %v1491 = vpop.permute.xlu0 %1490
      %1494 = vset.pattern.permute.xlu0 0
      %1495 = vperm.xlu0 %1494, %v1401
      %v1496 = vpop.permute.xlu0 %1495
      %1499 = vset.pattern.permute.xlu0 0
      %1500 = vperm.xlu0 %1499, %v1402
      %v1501 = vpop.permute.xlu0 %1500
      %1504 = vset.pattern.permute.xlu0 0
      %1505 = vperm.xlu0 %1504, %v1403
      %v1506 = vpop.permute.xlu0 %1505
      %1509 = vset.pattern.permute.xlu0 0
      %1510 = vperm.xlu0 %1509, %v1404
      %v1511 = vpop.permute.xlu0 %1510
      %1514 = vset.pattern.permute.xlu0 0
      %1515 = vperm.xlu0 %1514, %v1405
      %v1516 = vpop.permute.xlu0 %1515
      %1519 = vset.pattern.permute.xlu0 0
      %1520 = vperm.xlu0 %1519, %v1406
      %v1521 = vpop.permute.xlu0 %1520
      %1524 = vset.pattern.permute.xlu0 0
      %1525 = vperm.xlu0 %1524, %v1407
      %v1526 = vpop.permute.xlu0 %1525
      %1529 = vset.pattern.permute.xlu0 0
      %1530 = vperm.xlu0 %1529, %v1408
      %v1531 = vpop.permute.xlu0 %1530
      %1534 = vset.pattern.permute.xlu0 0
      %1535 = vperm.xlu0 %1534, %v1409
      %v1536 = vpop.permute.xlu0 %1535
      %1539 = vset.pattern.permute.xlu0 0
      %1540 = vperm.xlu0 %1539, %v1410
      %v1541 = vpop.permute.xlu0 %1540
      %v1543 = vadd.f32 %v1471, %v1486
      %v1544 = vadd.f32 %v1472, %v1491
      %v1545 = vadd.f32 %v1473, %v1496
      %v1546 = vadd.f32 %v1474, %v1501
      %v1547 = vadd.f32 %v1475, %v1506
      %v1548 = vadd.f32 %v1476, %v1511
      %v1549 = vadd.f32 %v1477, %v1516
      %v1550 = vadd.f32 %v1478, %v1521
      %v1551 = vadd.f32 %v1479, %v1526
      %v1552 = vadd.f32 %v1480, %v1531
      %v1553 = vadd.f32 %v1481, %v1536
      %v1554 = vadd.f32 %v1482, %v1541
      %v1555 = vld [vmem:[%s289] sm:$0xff]
      %v1556 = vld [vmem:[%s289 + $0x8] sm:$0xff]
      %v1557 = vld [vmem:[%s289 + $0x10] sm:$0xff]
      %v1558 = vld [vmem:[%s289 + $0x18] sm:$0xff]
      %v1559 = vld [vmem:[%s289 + $0x20] sm:$0xff]
      %v1560 = vld [vmem:[%s289 + $0x28] sm:$0xff]
      %v1561 = vld [vmem:[%s289 + $0x30] sm:$0xff]
      %v1562 = vld [vmem:[%s289 + $0x38] sm:$0xff]
      %v1563 = vld [vmem:[%s289 + $0x40] sm:$0xff]
      %v1564 = vld [vmem:[%s289 + $0x48] sm:$0xff]
      %v1565 = vld [vmem:[%s289 + $0x50] sm:$0xff]
      %v1566 = vld [vmem:[%s289 + $0x58] sm:$0xff]
      %v1567 = vadd.f32 %v1543, %v1555
      %v1568 = vadd.f32 %v1544, %v1556
      %v1569 = vadd.f32 %v1545, %v1557
      %v1570 = vadd.f32 %v1546, %v1558
      %v1571 = vadd.f32 %v1547, %v1559
      %v1572 = vadd.f32 %v1548, %v1560
      %v1573 = vadd.f32 %v1549, %v1561
      %v1574 = vadd.f32 %v1550, %v1562
      %v1575 = vadd.f32 %v1551, %v1563
      %v1576 = vadd.f32 %v1552, %v1564
      %v1577 = vadd.f32 %v1553, %v1565
      %v1578 = vadd.f32 %v1554, %v1566
      %1579 = vst.msk [vmem:[%s295] sm:$0xff] %vm1086, %v1567
      %1580 = vst.msk [vmem:[%s295 + $0x8] sm:$0xff] %vm1086, %v1568
      %1581 = vst.msk [vmem:[%s295 + $0x10] sm:$0xff] %vm1086, %v1569
      %1582 = vst.msk [vmem:[%s295 + $0x18] sm:$0xff] %vm1086, %v1570
      %1583 = vst.msk [vmem:[%s295 + $0x20] sm:$0xff] %vm1086, %v1571
      %1584 = vst.msk [vmem:[%s295 + $0x28] sm:$0xff] %vm1086, %v1572
      %1585 = vst.msk [vmem:[%s295 + $0x30] sm:$0xff] %vm1086, %v1573
      %1586 = vst.msk [vmem:[%s295 + $0x38] sm:$0xff] %vm1086, %v1574
      %1587 = vst.msk [vmem:[%s295 + $0x40] sm:$0xff] %vm1086, %v1575
      %1588 = vst.msk [vmem:[%s295 + $0x48] sm:$0xff] %vm1086, %v1576
      %1589 = vst.msk [vmem:[%s295 + $0x50] sm:$0xff] %vm1086, %v1577
      %1590 = vst.msk [vmem:[%s295 + $0x58] sm:$0xff] %vm1086, %v1578
      %s1591 = smul.u32 12, %s16
      %p1592 = scmp.lt.s32.totalorder %s1591, 23
      %s1593 = scalar_select %p1592, %s1591, 23
      %s1594 = smul.addr %s1593, 8
      %s1595 = scalar_lea.vmem %s5, %s1594
      // Predicated region
      $region41: #{tpu_custom_call.1} parent=39 // pred_check
        %p1596 = pneg %p159
      $region42: #{tpu_custom_call.1} parent=39 // pred_check_branch
        %1598 = sbr.rel (%p1596) target = $region44
      $region43: #{tpu_custom_call.1} parent=39 // pred_region
        %s1599 = smul.u32 12, %s16
      $region44: #{tpu_custom_call.1} parent=39 // pred_fallthru
        _
    $region40: #{tpu_custom_call.1} parent=5 // pred_fallthru
      _
    %p1600 = scmp.le.s32.totalorder 2, %s11
    // Predicated region
    $region45: #{tpu_custom_call.1} parent=5 // pred_check
      %p1601 = pneg %p1600
    $region46: #{tpu_custom_call.1} parent=5 // pred_check_branch
      %1603 = sbr.rel (%p1601) target = $region48
    $region47: #{tpu_custom_call.1} parent=5 // pred_region
      %s1604 = ssub.s32 %s11, 2
      // Predicated region
      $region49: #{tpu_custom_call.1} parent=47 // pred_check
        %p1605 = pneg %p165
      $region50: #{tpu_custom_call.1} parent=47 // pred_check_branch
        %1607 = sbr.rel (%p1605) target = $region52
      $region51: #{tpu_custom_call.1} parent=47 // pred_region
        %s1608 = smul.u32 12, %s17
        %p1609 = scmp.lt.s32.totalorder %s1608, 23
        %s1610 = scalar_select %p1609, %s1608, 23
        %s1611 = smul.addr %s1610, 8
        %s1612 = scalar_lea.vmem %s5, %s1611
      $region52: #{tpu_custom_call.1} parent=47 // pred_fallthru
        _
    $region48: #{tpu_custom_call.1} parent=5 // pred_fallthru
      _
  $region6: #{tpu_custom_call.1} parent=0 // loop_footer
    %s15 = sadd.s32 1, %s11
  $region7: #{tpu_custom_call.1} parent=0 // loop_footer_branch
    %10 = sbr.rel target = $region3
  $region8: #{tpu_custom_call.1} parent=0 // loop_exit
    _

</llo_original>
